<compile_context>
chip_gen: v7x
topology: tpu7x:2x2x1
jax: 0.10.0
libtpu: 0.0.40
codegen_flags: <defaults>
</compile_context>

<pallas_src>
import functools

import jax
import jax.numpy as jnp
from jax import lax
from jax.experimental import pallas as pl
from jax.experimental.pallas import tpu as pltpu

BN_EPS = 1e-5
LANE = 128


# ---------------------------------------------------------------------------
# Helpers
# ---------------------------------------------------------------------------
def _round_up(n, m):
    return ((n + m - 1) // m) * m


def _pick_row_tile(ho, target=8):
    # Largest divisor of ho that is <= target (keeps >= 2 row tiles for typical sizes).
    for d in range(min(target, ho), 0, -1):
        if ho % d == 0:
            return d
    return ho


def _fold_bn(gamma, beta, mean, var):
    scale = gamma / jnp.sqrt(var + BN_EPS)
    bias = beta - mean * scale
    return scale, bias


def _pad_lane(v, cp):
    # (C,) f32 -> (1, Cp) f32, zero-padded (padded channels stay exactly 0 end-to-end).
    return jnp.pad(v, (0, cp - v.shape[0])).reshape(1, cp).astype(jnp.float32)


def _pad_mat(w, rp, cp):
    return jnp.pad(w, ((0, rp - w.shape[0]), (0, cp - w.shape[1]))).astype(jnp.bfloat16)


# ---------------------------------------------------------------------------
# Fused inverted-residual block kernel
# ---------------------------------------------------------------------------
def _fused_block_kernel(*refs, H, W, Ho, Wo, THo, stride, has_residual, proj):
    if has_residual and proj:
        (x_ref, w1_ref, s1_ref, b1_ref, wd_ref, sd_ref, bd_ref,
         w2_ref, s2_ref, b2_ref, ws_ref, ss_ref, bs_ref, o_ref) = refs
    else:
        (x_ref, w1_ref, s1_ref, b1_ref, wd_ref, sd_ref, bd_ref,
         w2_ref, s2_ref, b2_ref, o_ref) = refs

    th = pl.program_id(1)
    rows_in = (THo - 1) * stride + 3                 # padded-input rows for this tile
    r0 = pl.multiple_of(th * (THo * stride), THo * stride)

    # Input row slab (spatially pre-padded, channels padded to 128), upcast once so all
    # sublane-offset slicing below happens on f32 (native (8,128) layout).
    xt = x_ref[pl.ds(r0, rows_in), :, :].astype(jnp.float32)   # (rows_in, Wp, Cin_p)
    Wp = xt.shape[1]
    cin_p = xt.shape[2]

    # ---- pw1: 1x1 conv (Cin_p -> Ce_p) + BN + ReLU6, bf16 MXU with f32 accumulate ----
    x2d = xt.reshape(rows_in * Wp, cin_p).astype(jnp.bfloat16)
    a = jnp.dot(x2d, w1_ref[...], preferred_element_type=jnp.float32)
    a = jnp.clip(a * s1_ref[...] + b1_ref[...], 0.0, 6.0)
    ce_p = a.shape[-1]
    a = a.reshape(rows_in, Wp, ce_p)

    # ---- zero the depthwise halo (conv padding=1) in-register; never touches HBM ----
    row_g = lax.broadcasted_iota(jnp.int32, (rows_in, Wp, ce_p), 0) + r0
    col_g = lax.broadcasted_iota(jnp.int32, (rows_in, Wp, ce_p), 1)
    valid = (row_g >= 1) & (row_g <= H) & (col_g >= 1) & (col_g <= W)
    a = jnp.where(valid, a, 0.0)

    # ---- 3x3 depthwise conv (stride s) + BN + ReLU6 on the VPU (128 lanes dense) ----
    acc = jnp.zeros((THo, Wo, ce_p), jnp.float32)
    for kh in range(3):
        for kw in range(3):
            win = a[kh:kh + (THo - 1) * stride + 1:stride,
                    kw:kw + (Wo - 1) * stride + 1:stride, :]
            acc = acc + win * wd_ref[kh, kw, :]
    d = jnp.clip(acc * sd_ref[...] + bd_ref[...], 0.0, 6.0)

    # ---- pw2: 1x1 conv (Ce_p -> Cout_p) + BN, residual fused into the epilogue ----
    d2 = d.reshape(THo * Wo, ce_p).astype(jnp.bfloat16)
    y = jnp.dot(d2, w2_ref[...], preferred_element_type=jnp.float32)
    y = y * s2_ref[...] + b2_ref[...]

    if has_residual:
        xs = xt[1:THo + 1, 1:W + 1, :]               # shortcut rows for this tile
        xs = xs.reshape(THo * Wo, cin_p)
        if proj:                                     # 1x1 projected shortcut + BN
            sc = jnp.dot(xs.astype(jnp.bfloat16), ws_ref[...],
                         preferred_element_type=jnp.float32)
            sc = sc * ss_ref[...] + bs_ref[...]
        else:                                        # identity shortcut
            sc = xs
        y = y + sc

    o_ref[...] = y.reshape(THo, Wo, -1).astype(o_ref.dtype)


# ---------------------------------------------------------------------------
# Block wrappers
# ---------------------------------------------------------------------------
def blk_stride_forward_nhwc(x_nhwc, params, stride):
    """Fused inverted-residual block. x_nhwc: (N, H, W, Cin) float32 -> NHWC output."""
    N, H, W, Cin = x_nhwc.shape
    Ce = params["w1"].shape[1]
    Cout = params["w2"].shape[1]
    cin_p, ce_p, cout_p = (_round_up(c, LANE) for c in (Cin, Ce, Cout))

    Ho = (H + 2 - 3) // stride + 1
    Wo = (W + 2 - 3) // stride + 1
    THo = _pick_row_tile(Ho)
    nH = Ho // THo

    # Pad ONLY the small input: +1 spatial halo (to a width multiple of 8 for cheap
    # in-kernel reshapes) and channel pad to 128; cast to bf16 to halve HBM traffic.
    Hp = H + 2
    Wp = _round_up(W + 2, 8)
    xp = jnp.pad(x_nhwc, ((0, 0), (1, 1), (1, Wp - W - 1), (0, cin_p - Cin)))
    xp = xp.astype(jnp.bfloat16)

    s1, b1 = _fold_bn(*params["bn1"])
    sd, bd = _fold_bn(*params["bnd"])
    s2, b2 = _fold_bn(*params["bn2"])

    w1 = _pad_mat(params["w1"], cin_p, ce_p)
    w2 = _pad_mat(params["w2"], ce_p, cout_p)
    wd = jnp.pad(params["wd"], ((0, 0), (0, 0), (0, ce_p - Ce))).astype(jnp.float32)

    has_residual = stride == 1
    proj = has_residual and ("ws" in params)

    args = [xp, w1, _pad_lane(s1, ce_p), _pad_lane(b1, ce_p),
            wd, _pad_lane(sd, ce_p), _pad_lane(bd, ce_p),
            w2, _pad_lane(s2, cout_p), _pad_lane(b2, cout_p)]

    def full(shape):
        return pl.BlockSpec(shape, lambda n, t: (0,) * len(shape))

    in_specs = [
        # whole padded image resident per batch index (re-used by all row tiles)
        pl.BlockSpec((None, Hp, Wp, cin_p), lambda n, t: (n, 0, 0, 0)),
        full((cin_p, ce_p)), full((1, ce_p)), full((1, ce_p)),
        full((3, 3, ce_p)), full((1, ce_p)), full((1, ce_p)),
        full((ce_p, cout_p)), full((1, cout_p)), full((1, cout_p)),
    ]
    if proj:
        ss, bs = _fold_bn(*params["bns"])
        args += [_pad_mat(params["ws"], cin_p, cout_p),
                 _pad_lane(ss, cout_p), _pad_lane(bs, cout_p)]
        in_specs += [full((cin_p, cout_p)), full((1, cout_p)), full((1, cout_p))]

    kernel = functools.partial(
        _fused_block_kernel, H=H, W=W, Ho=Ho, Wo=Wo, THo=THo,
        stride=stride, has_residual=has_residual, proj=proj)

    out = pl.pallas_call(
        kernel,
        out_shape=jax.ShapeDtypeStruct((N, Ho, Wo, cout_p), jnp.float32),
        grid=(N, nH),
        in_specs=in_specs,
        out_specs=pl.BlockSpec((None, THo, Wo, cout_p), lambda n, t: (n, t, 0, 0)),
        compiler_params=pltpu.CompilerParams(
            dimension_semantics=("parallel", "parallel")),
    )(*args)
    return out[..., :Cout]


def blk_stride_forward(x_nchw, params, stride):
    # NCHW (PyTorch) boundary only; chained blocks should use the NHWC entry point.
    x = jnp.transpose(x_nchw, (0, 2, 3, 1)).astype(jnp.float32)
    y = blk_stride_forward_nhwc(x, params, stride)
    return jnp.transpose(y, (0, 3, 1, 2))


# ---------------------------------------------------------------------------
# Parameter setup (deterministic, synthetic)
# ---------------------------------------------------------------------------
def init_params(key, in_channels, out_channels, t, stride):
    exp = in_channels * t
    keys = jax.random.split(key, 8)

    def conv_w(k, cin, cout):
        return jax.random.normal(k, (cin, cout), jnp.float32) / jnp.sqrt(float(cin))

    def bn_p(k, c):
        kg, kb, km, kv = jax.random.split(k, 4)
        gamma = jax.random.uniform(kg, (c,), jnp.float32, 0.5, 1.5)
        beta = 0.1 * jax.random.normal(kb, (c,), jnp.float32)
        mean = 0.1 * jax.random.normal(km, (c,), jnp.float32)
        var = jax.random.uniform(kv, (c,), jnp.float32, 0.5, 1.5)
        return gamma, beta, mean, var

    params = {
        "w1": conv_w(keys[0], in_channels, exp),                           # 1x1 expand
        "bn1": bn_p(keys[1], exp),
        "wd": jax.random.normal(keys[2], (3, 3, exp), jnp.float32) / 3.0,  # depthwise
        "bnd": bn_p(keys[3], exp),
        "w2": conv_w(keys[4], exp, out_channels),                          # 1x1 project
        "bn2": bn_p(keys[5], out_channels),
    }
    if stride == 1 and in_channels != out_channels:
        params["ws"] = conv_w(keys[6], in_channels, out_channels)          # shortcut
        params["bns"] = bn_p(keys[7], out_channels)
    return params


# ---------------------------------------------------------------------------
# Pure-JAX reference (mirrors the kernel's bf16 matmul-operand rounding)
# ---------------------------------------------------------------------------
def _ref_forward(x_nchw, params, stride):
    q = lambda t: t.astype(jnp.bfloat16).astype(jnp.float32)
    x = jnp.transpose(x_nchw, (0, 2, 3, 1)).astype(jnp.float32)
    xq = q(x)

    def pw(v, w, bn, relu6):
        s, b = _fold_bn(*bn)
        y = jnp.einsum("nhwc,cd->nhwd", q(v), q(w)) * s + b
        return jnp.clip(y, 0.0, 6.0) if relu6 else y

    r = pw(xq, params["w1"], params["bn1"], True)
    N, H, W, C = r.shape
    Ho = (H + 2 - 3) // stride + 1
    Wo = (W + 2 - 3) // stride + 1
    rp = jnp.pad(r, ((0, 0), (1, 1), (1, 1), (0, 0)))
    acc = jnp.zeros((N, Ho, Wo, C), jnp.float32)
    for kh in range(3):
        for kw in range(3):
            acc = acc + rp[:, kh:kh + (Ho - 1) * stride + 1:stride,
                           kw:kw + (Wo - 1) * stride + 1:stride, :] * params["wd"][kh, kw]
    sd, bd = _fold_bn(*params["bnd"])
    r = jnp.clip(acc * sd + bd, 0.0, 6.0)
    r = pw(r, params["w2"], params["bn2"], False)
    if stride == 1:
        sc = pw(xq, params["ws"], params["bns"], False) if "ws" in params else xq
        r = r + sc
    return jnp.transpose(r, (0, 3, 1, 2))


if __name__ == "__main__":
    key = jax.random.PRNGKey(0)
    kx, kp1, kp2 = jax.random.split(key, 3)

    # Small shapes consistent with the module: NCHW input, in_channels=4, 16x16 spatial.
    N, Cin, H, W = 2, 4, 16, 16
    x = jax.random.normal(kx, (N, Cin, H, W), jnp.float32)

    fwd = jax.jit(blk_stride_forward, static_argnames=("stride",))

    # Config 1: t=4, Cin=4 -> Cout=8, stride=1 (projected 1x1 shortcut + BN).
    p1 = init_params(kp1, Cin, 8, 4, 1)
    y1 = fwd(x, p1, stride=1)
    jax.block_until_ready(y1)
    assert y1.shape == (N, 8, H, W), y1.shape
    r1 = _ref_forward(x, p1, 1)
    assert jnp.allclose(y1, r1, atol=1e-3, rtol=1e-3), float(jnp.max(jnp.abs(y1 - r1)))

    # Config 2: Cin == Cout, stride=1 (identity shortcut path).
    p2 = init_params(kp2, Cin, Cin, 4, 1)
    y2 = fwd(x, p2, stride=1)
    jax.block_until_ready(y2)
    assert y2.shape == (N, Cin, H, W), y2.shape
    r2 = _ref_forward(x, p2, 1)
    assert jnp.allclose(y2, r2, atol=1e-3, rtol=1e-3), float(jnp.max(jnp.abs(y2 - r2)))

    print("KERNEL_OK")
</pallas_src>

<mosaic_0001>
module attributes {stable_mosaic.version = 11 : i64} {
  func.func @_fused_block_kernel(%arg0: i32, %arg1: i32, %arg2: memref<1x18x24x128xbf16, #tpu.memory_space<vmem>>, %arg3: memref<128x128xbf16, #tpu.memory_space<vmem>>, %arg4: memref<1x128xf32, #tpu.memory_space<vmem>>, %arg5: memref<1x128xf32, #tpu.memory_space<vmem>>, %arg6: memref<3x3x128xf32, #tpu.memory_space<vmem>>, %arg7: memref<1x128xf32, #tpu.memory_space<vmem>>, %arg8: memref<1x128xf32, #tpu.memory_space<vmem>>, %arg9: memref<128x128xbf16, #tpu.memory_space<vmem>>, %arg10: memref<1x128xf32, #tpu.memory_space<vmem>>, %arg11: memref<1x128xf32, #tpu.memory_space<vmem>>, %arg12: memref<128x128xbf16, #tpu.memory_space<vmem>>, %arg13: memref<1x128xf32, #tpu.memory_space<vmem>>, %arg14: memref<1x128xf32, #tpu.memory_space<vmem>>, %arg15: memref<1x8x16x128xf32, #tpu.memory_space<vmem>>) attributes {dimension_semantics = [#tpu.dimension_semantics<parallel>, #tpu.dimension_semantics<parallel>], iteration_bounds = array<i64: 2, 2>, scalar_prefetch = 0 : i64, scratch_operands = 0 : i64, tpu.core_type = #tpu.core_type<tc>, window_params = [{transform_indices = @transform_0, window_bounds = array<i64: 1, 18, 24, 128>}, {pipeline_mode = #tpu.pipeline_mode<synchronous>, transform_indices = @transform_1, window_bounds = array<i64: 128, 128>}, {pipeline_mode = #tpu.pipeline_mode<synchronous>, transform_indices = @transform_2, window_bounds = array<i64: 1, 128>}, {pipeline_mode = #tpu.pipeline_mode<synchronous>, transform_indices = @transform_3, window_bounds = array<i64: 1, 128>}, {pipeline_mode = #tpu.pipeline_mode<synchronous>, transform_indices = @transform_4, window_bounds = array<i64: 3, 3, 128>}, {pipeline_mode = #tpu.pipeline_mode<synchronous>, transform_indices = @transform_5, window_bounds = array<i64: 1, 128>}, {pipeline_mode = #tpu.pipeline_mode<synchronous>, transform_indices = @transform_6, window_bounds = array<i64: 1, 128>}, {pipeline_mode = #tpu.pipeline_mode<synchronous>, transform_indices = @transform_7, window_bounds = array<i64: 128, 128>}, {pipeline_mode = #tpu.pipeline_mode<synchronous>, transform_indices = @transform_8, window_bounds = array<i64: 1, 128>}, {pipeline_mode = #tpu.pipeline_mode<synchronous>, transform_indices = @transform_9, window_bounds = array<i64: 1, 128>}, {pipeline_mode = #tpu.pipeline_mode<synchronous>, transform_indices = @transform_10, window_bounds = array<i64: 128, 128>}, {pipeline_mode = #tpu.pipeline_mode<synchronous>, transform_indices = @transform_11, window_bounds = array<i64: 1, 128>}, {pipeline_mode = #tpu.pipeline_mode<synchronous>, transform_indices = @transform_12, window_bounds = array<i64: 1, 128>}, {transform_indices = @transform_13, window_bounds = array<i64: 1, 8, 16, 128>}]} {
    %c8_i32 = arith.constant 8 : i32
    %0 = arith.muli %arg1, %c8_i32 : i32
    %1 = tpu.assume_multiple %0, 8 : i32
    %c0 = arith.constant 0 : index
    %2 = arith.index_cast %1 : i32 to index
    %c0_0 = arith.constant 0 : index
    %c0_1 = arith.constant 0 : index
    %3 = vector.load %arg2[%c0, %2, %c0_0, %c0_1] : memref<1x18x24x128xbf16, #tpu.memory_space<vmem>>, vector<1x10x24x128xbf16>
    %4 = vector.shape_cast %3 : vector<1x10x24x128xbf16> to vector<10x24x128xbf16>
    %5 = arith.extf %4 : vector<10x24x128xbf16> to vector<10x24x128xf32>
    %6 = vector.shape_cast %5 : vector<10x24x128xf32> to vector<240x128xf32>
    %7 = arith.truncf %6 : vector<240x128xf32> to vector<240x128xbf16>
    %c0_2 = arith.constant 0 : index
    %c0_3 = arith.constant 0 : index
    %8 = vector.load %arg3[%c0_2, %c0_3] : memref<128x128xbf16, #tpu.memory_space<vmem>>, vector<128x128xbf16>
    %cst = arith.constant dense<0.000000e+00> : vector<240x128xf32>
    %9 = tpu.matmul %7, %8, %cst {dimension_numbers = #tpu.dot_dimension_numbers<[1], [0], [0], [1], [0, 0, 1, 1], [], []>} : vector<240x128xbf16>, vector<128x128xbf16>, vector<240x128xf32> -> vector<240x128xf32>
    %c0_4 = arith.constant 0 : index
    %c0_5 = arith.constant 0 : index
    %10 = vector.load %arg4[%c0_4, %c0_5] : memref<1x128xf32, #tpu.memory_space<vmem>>, vector<1x128xf32>
    %11 = vector.broadcast %10 : vector<1x128xf32> to vector<240x128xf32>
    %12 = arith.mulf %9, %11 : vector<240x128xf32>
    %c0_6 = arith.constant 0 : index
    %c0_7 = arith.constant 0 : index
    %13 = vector.load %arg5[%c0_6, %c0_7] : memref<1x128xf32, #tpu.memory_space<vmem>>, vector<1x128xf32>
    %14 = vector.broadcast %13 : vector<1x128xf32> to vector<240x128xf32>
    %15 = arith.addf %12, %14 : vector<240x128xf32>
    %cst_8 = arith.constant 0.000000e+00 : f32
    %cst_9 = arith.constant 6.000000e+00 : f32
    %16 = vector.broadcast %cst_8 : f32 to vector<240x128xf32>
    %17 = arith.maximumf %16, %15 : vector<240x128xf32>
    %18 = vector.broadcast %cst_9 : f32 to vector<240x128xf32>
    %19 = arith.minimumf %18, %17 : vector<240x128xf32>
    %20 = vector.shape_cast %19 : vector<240x128xf32> to vector<10x24x128xf32>
    %21 = tpu.iota {dimensions = array<i32: 0>} : vector<10x24x128xi32>
    %22 = vector.broadcast %1 : i32 to vector<10x24x128xi32>
    %23 = arith.addi %21, %22 : vector<10x24x128xi32>
    %24 = tpu.iota {dimensions = array<i32: 1>} : vector<10x24x128xi32>
    %c1_i32 = arith.constant 1 : i32
    %25 = vector.broadcast %c1_i32 : i32 to vector<10x24x128xi32>
    %26 = arith.cmpi sge, %23, %25 : vector<10x24x128xi32>
    %c16_i32 = arith.constant 16 : i32
    %27 = vector.broadcast %c16_i32 : i32 to vector<10x24x128xi32>
    %28 = arith.cmpi sle, %23, %27 : vector<10x24x128xi32>
    %29 = arith.andi %26, %28 : vector<10x24x128xi1>
    %c1_i32_10 = arith.constant 1 : i32
    %30 = vector.broadcast %c1_i32_10 : i32 to vector<10x24x128xi32>
    %31 = arith.cmpi sge, %24, %30 : vector<10x24x128xi32>
    %32 = arith.andi %29, %31 : vector<10x24x128xi1>
    %c16_i32_11 = arith.constant 16 : i32
    %33 = vector.broadcast %c16_i32_11 : i32 to vector<10x24x128xi32>
    %34 = arith.cmpi sle, %24, %33 : vector<10x24x128xi32>
    %35 = arith.andi %32, %34 : vector<10x24x128xi1>
    %cst_12 = arith.constant 0.000000e+00 : f32
    %36 = vector.broadcast %cst_12 : f32 to vector<10x24x128xf32>
    %37 = arith.select %35, %20, %36 : vector<10x24x128xi1>, vector<10x24x128xf32>
    %cst_13 = arith.constant 0.000000e+00 : f32
    %38 = vector.broadcast %cst_13 : f32 to vector<8x16x128xf32>
    %39 = vector.extract_strided_slice %37 {offsets = [0, 0, 0], sizes = [8, 16, 128], strides = [1, 1, 1]} : vector<10x24x128xf32> to vector<8x16x128xf32>
    %c0_14 = arith.constant 0 : index
    %c0_15 = arith.constant 0 : index
    %c0_16 = arith.constant 0 : index
    %40 = vector.load %arg6[%c0_14, %c0_15, %c0_16] : memref<3x3x128xf32, #tpu.memory_space<vmem>>, vector<1x1x128xf32>
    %41 = vector.shape_cast %40 : vector<1x1x128xf32> to vector<128xf32>
    %42 = vector.shape_cast %41 : vector<128xf32> to vector<1x1x128xf32>
    %43 = vector.broadcast %42 : vector<1x1x128xf32> to vector<8x16x128xf32>
    %44 = arith.mulf %39, %43 : vector<8x16x128xf32>
    %45 = arith.addf %38, %44 : vector<8x16x128xf32>
    %46 = vector.extract_strided_slice %37 {offsets = [0, 1, 0], sizes = [8, 16, 128], strides = [1, 1, 1]} : vector<10x24x128xf32> to vector<8x16x128xf32>
    %c0_17 = arith.constant 0 : index
    %c1 = arith.constant 1 : index
    %c0_18 = arith.constant 0 : index
    %47 = vector.load %arg6[%c0_17, %c1, %c0_18] : memref<3x3x128xf32, #tpu.memory_space<vmem>>, vector<1x1x128xf32>
    %48 = vector.shape_cast %47 : vector<1x1x128xf32> to vector<128xf32>
    %49 = vector.shape_cast %48 : vector<128xf32> to vector<1x1x128xf32>
    %50 = vector.broadcast %49 : vector<1x1x128xf32> to vector<8x16x128xf32>
    %51 = arith.mulf %46, %50 : vector<8x16x128xf32>
    %52 = arith.addf %45, %51 : vector<8x16x128xf32>
    %53 = vector.extract_strided_slice %37 {offsets = [0, 2, 0], sizes = [8, 16, 128], strides = [1, 1, 1]} : vector<10x24x128xf32> to vector<8x16x128xf32>
    %c0_19 = arith.constant 0 : index
    %c2 = arith.constant 2 : index
    %c0_20 = arith.constant 0 : index
    %54 = vector.load %arg6[%c0_19, %c2, %c0_20] : memref<3x3x128xf32, #tpu.memory_space<vmem>>, vector<1x1x128xf32>
    %55 = vector.shape_cast %54 : vector<1x1x128xf32> to vector<128xf32>
    %56 = vector.shape_cast %55 : vector<128xf32> to vector<1x1x128xf32>
    %57 = vector.broadcast %56 : vector<1x1x128xf32> to vector<8x16x128xf32>
    %58 = arith.mulf %53, %57 : vector<8x16x128xf32>
    %59 = arith.addf %52, %58 : vector<8x16x128xf32>
    %60 = vector.extract_strided_slice %37 {offsets = [1, 0, 0], sizes = [8, 16, 128], strides = [1, 1, 1]} : vector<10x24x128xf32> to vector<8x16x128xf32>
    %c1_21 = arith.constant 1 : index
    %c0_22 = arith.constant 0 : index
    %c0_23 = arith.constant 0 : index
    %61 = vector.load %arg6[%c1_21, %c0_22, %c0_23] : memref<3x3x128xf32, #tpu.memory_space<vmem>>, vector<1x1x128xf32>
    %62 = vector.shape_cast %61 : vector<1x1x128xf32> to vector<128xf32>
    %63 = vector.shape_cast %62 : vector<128xf32> to vector<1x1x128xf32>
    %64 = vector.broadcast %63 : vector<1x1x128xf32> to vector<8x16x128xf32>
    %65 = arith.mulf %60, %64 : vector<8x16x128xf32>
    %66 = arith.addf %59, %65 : vector<8x16x128xf32>
    %67 = vector.extract_strided_slice %37 {offsets = [1, 1, 0], sizes = [8, 16, 128], strides = [1, 1, 1]} : vector<10x24x128xf32> to vector<8x16x128xf32>
    %c1_24 = arith.constant 1 : index
    %c1_25 = arith.constant 1 : index
    %c0_26 = arith.constant 0 : index
    %68 = vector.load %arg6[%c1_24, %c1_25, %c0_26] : memref<3x3x128xf32, #tpu.memory_space<vmem>>, vector<1x1x128xf32>
    %69 = vector.shape_cast %68 : vector<1x1x128xf32> to vector<128xf32>
    %70 = vector.shape_cast %69 : vector<128xf32> to vector<1x1x128xf32>
    %71 = vector.broadcast %70 : vector<1x1x128xf32> to vector<8x16x128xf32>
    %72 = arith.mulf %67, %71 : vector<8x16x128xf32>
    %73 = arith.addf %66, %72 : vector<8x16x128xf32>
    %74 = vector.extract_strided_slice %37 {offsets = [1, 2, 0], sizes = [8, 16, 128], strides = [1, 1, 1]} : vector<10x24x128xf32> to vector<8x16x128xf32>
    %c1_27 = arith.constant 1 : index
    %c2_28 = arith.constant 2 : index
    %c0_29 = arith.constant 0 : index
    %75 = vector.load %arg6[%c1_27, %c2_28, %c0_29] : memref<3x3x128xf32, #tpu.memory_space<vmem>>, vector<1x1x128xf32>
    %76 = vector.shape_cast %75 : vector<1x1x128xf32> to vector<128xf32>
    %77 = vector.shape_cast %76 : vector<128xf32> to vector<1x1x128xf32>
    %78 = vector.broadcast %77 : vector<1x1x128xf32> to vector<8x16x128xf32>
    %79 = arith.mulf %74, %78 : vector<8x16x128xf32>
    %80 = arith.addf %73, %79 : vector<8x16x128xf32>
    %81 = vector.extract_strided_slice %37 {offsets = [2, 0, 0], sizes = [8, 16, 128], strides = [1, 1, 1]} : vector<10x24x128xf32> to vector<8x16x128xf32>
    %c2_30 = arith.constant 2 : index
    %c0_31 = arith.constant 0 : index
    %c0_32 = arith.constant 0 : index
    %82 = vector.load %arg6[%c2_30, %c0_31, %c0_32] : memref<3x3x128xf32, #tpu.memory_space<vmem>>, vector<1x1x128xf32>
    %83 = vector.shape_cast %82 : vector<1x1x128xf32> to vector<128xf32>
    %84 = vector.shape_cast %83 : vector<128xf32> to vector<1x1x128xf32>
    %85 = vector.broadcast %84 : vector<1x1x128xf32> to vector<8x16x128xf32>
    %86 = arith.mulf %81, %85 : vector<8x16x128xf32>
    %87 = arith.addf %80, %86 : vector<8x16x128xf32>
    %88 = vector.extract_strided_slice %37 {offsets = [2, 1, 0], sizes = [8, 16, 128], strides = [1, 1, 1]} : vector<10x24x128xf32> to vector<8x16x128xf32>
    %c2_33 = arith.constant 2 : index
    %c1_34 = arith.constant 1 : index
    %c0_35 = arith.constant 0 : index
    %89 = vector.load %arg6[%c2_33, %c1_34, %c0_35] : memref<3x3x128xf32, #tpu.memory_space<vmem>>, vector<1x1x128xf32>
    %90 = vector.shape_cast %89 : vector<1x1x128xf32> to vector<128xf32>
    %91 = vector.shape_cast %90 : vector<128xf32> to vector<1x1x128xf32>
    %92 = vector.broadcast %91 : vector<1x1x128xf32> to vector<8x16x128xf32>
    %93 = arith.mulf %88, %92 : vector<8x16x128xf32>
    %94 = arith.addf %87, %93 : vector<8x16x128xf32>
    %95 = vector.extract_strided_slice %37 {offsets = [2, 2, 0], sizes = [8, 16, 128], strides = [1, 1, 1]} : vector<10x24x128xf32> to vector<8x16x128xf32>
    %c2_36 = arith.constant 2 : index
    %c2_37 = arith.constant 2 : index
    %c0_38 = arith.constant 0 : index
    %96 = vector.load %arg6[%c2_36, %c2_37, %c0_38] : memref<3x3x128xf32, #tpu.memory_space<vmem>>, vector<1x1x128xf32>
    %97 = vector.shape_cast %96 : vector<1x1x128xf32> to vector<128xf32>
    %98 = vector.shape_cast %97 : vector<128xf32> to vector<1x1x128xf32>
    %99 = vector.broadcast %98 : vector<1x1x128xf32> to vector<8x16x128xf32>
    %100 = arith.mulf %95, %99 : vector<8x16x128xf32>
    %101 = arith.addf %94, %100 : vector<8x16x128xf32>
    %c0_39 = arith.constant 0 : index
    %c0_40 = arith.constant 0 : index
    %102 = vector.load %arg7[%c0_39, %c0_40] : memref<1x128xf32, #tpu.memory_space<vmem>>, vector<1x128xf32>
    %103 = vector.shape_cast %102 : vector<1x128xf32> to vector<1x1x128xf32>
    %104 = vector.broadcast %103 : vector<1x1x128xf32> to vector<8x16x128xf32>
    %105 = arith.mulf %101, %104 : vector<8x16x128xf32>
    %c0_41 = arith.constant 0 : index
    %c0_42 = arith.constant 0 : index
    %106 = vector.load %arg8[%c0_41, %c0_42] : memref<1x128xf32, #tpu.memory_space<vmem>>, vector<1x128xf32>
    %107 = vector.shape_cast %106 : vector<1x128xf32> to vector<1x1x128xf32>
    %108 = vector.broadcast %107 : vector<1x1x128xf32> to vector<8x16x128xf32>
    %109 = arith.addf %105, %108 : vector<8x16x128xf32>
    %cst_43 = arith.constant 0.000000e+00 : f32
    %cst_44 = arith.constant 6.000000e+00 : f32
    %110 = vector.broadcast %cst_43 : f32 to vector<8x16x128xf32>
    %111 = arith.maximumf %110, %109 : vector<8x16x128xf32>
    %112 = vector.broadcast %cst_44 : f32 to vector<8x16x128xf32>
    %113 = arith.minimumf %112, %111 : vector<8x16x128xf32>
    %114 = vector.shape_cast %113 : vector<8x16x128xf32> to vector<128x128xf32>
    %115 = arith.truncf %114 : vector<128x128xf32> to vector<128x128xbf16>
    %c0_45 = arith.constant 0 : index
    %c0_46 = arith.constant 0 : index
    %116 = vector.load %arg9[%c0_45, %c0_46] : memref<128x128xbf16, #tpu.memory_space<vmem>>, vector<128x128xbf16>
    %cst_47 = arith.constant dense<0.000000e+00> : vector<128x128xf32>
    %117 = tpu.matmul %115, %116, %cst_47 {dimension_numbers = #tpu.dot_dimension_numbers<[1], [0], [0], [1], [0, 0, 1, 1], [], []>} : vector<128x128xbf16>, vector<128x128xbf16>, vector<128x128xf32> -> vector<128x128xf32>
    %c0_48 = arith.constant 0 : index
    %c0_49 = arith.constant 0 : index
    %118 = vector.load %arg10[%c0_48, %c0_49] : memref<1x128xf32, #tpu.memory_space<vmem>>, vector<1x128xf32>
    %119 = vector.broadcast %118 : vector<1x128xf32> to vector<128x128xf32>
    %120 = arith.mulf %117, %119 : vector<128x128xf32>
    %c0_50 = arith.constant 0 : index
    %c0_51 = arith.constant 0 : index
    %121 = vector.load %arg11[%c0_50, %c0_51] : memref<1x128xf32, #tpu.memory_space<vmem>>, vector<1x128xf32>
    %122 = vector.broadcast %121 : vector<1x128xf32> to vector<128x128xf32>
    %123 = arith.addf %120, %122 : vector<128x128xf32>
    %124 = vector.extract_strided_slice %5 {offsets = [1, 1, 0], sizes = [8, 16, 128], strides = [1, 1, 1]} : vector<10x24x128xf32> to vector<8x16x128xf32>
    %125 = vector.shape_cast %124 : vector<8x16x128xf32> to vector<128x128xf32>
    %126 = arith.truncf %125 : vector<128x128xf32> to vector<128x128xbf16>
    %c0_52 = arith.constant 0 : index
    %c0_53 = arith.constant 0 : index
    %127 = vector.load %arg12[%c0_52, %c0_53] : memref<128x128xbf16, #tpu.memory_space<vmem>>, vector<128x128xbf16>
    %cst_54 = arith.constant dense<0.000000e+00> : vector<128x128xf32>
    %128 = tpu.matmul %126, %127, %cst_54 {dimension_numbers = #tpu.dot_dimension_numbers<[1], [0], [0], [1], [0, 0, 1, 1], [], []>} : vector<128x128xbf16>, vector<128x128xbf16>, vector<128x128xf32> -> vector<128x128xf32>
    %c0_55 = arith.constant 0 : index
    %c0_56 = arith.constant 0 : index
    %129 = vector.load %arg13[%c0_55, %c0_56] : memref<1x128xf32, #tpu.memory_space<vmem>>, vector<1x128xf32>
    %130 = vector.broadcast %129 : vector<1x128xf32> to vector<128x128xf32>
    %131 = arith.mulf %128, %130 : vector<128x128xf32>
    %c0_57 = arith.constant 0 : index
    %c0_58 = arith.constant 0 : index
    %132 = vector.load %arg14[%c0_57, %c0_58] : memref<1x128xf32, #tpu.memory_space<vmem>>, vector<1x128xf32>
    %133 = vector.broadcast %132 : vector<1x128xf32> to vector<128x128xf32>
    %134 = arith.addf %131, %133 : vector<128x128xf32>
    %135 = arith.addf %123, %134 : vector<128x128xf32>
    %136 = vector.shape_cast %135 : vector<128x128xf32> to vector<8x16x128xf32>
    %c0_59 = arith.constant 0 : index
    %c0_60 = arith.constant 0 : index
    %c0_61 = arith.constant 0 : index
    %c0_62 = arith.constant 0 : index
    %137 = vector.load %arg15[%c0_59, %c0_60, %c0_61, %c0_62] : memref<1x8x16x128xf32, #tpu.memory_space<vmem>>, vector<1x8x16x128xf32>
    %138 = vector.shape_cast %137 : vector<1x8x16x128xf32> to vector<8x16x128xf32>
    %139 = vector.shape_cast %136 : vector<8x16x128xf32> to vector<1x8x16x128xf32>
    tpu.vector_store %arg15[%c0_59, %c0_60, %c0_61, %c0_62], %139 {strides = array<i32>} : memref<1x8x16x128xf32, #tpu.memory_space<vmem>>, vector<1x8x16x128xf32>,
    return
  }
  func.func @transform_0(%arg0: i32, %arg1: i32) -> (i32, i32, i32, i32) {
    %c0_i32 = arith.constant 0 : i32
    %c0_i32_0 = arith.constant 0 : i32
    %c0_i32_1 = arith.constant 0 : i32
    %c0_i32_2 = arith.constant 0 : i32
    return %arg0, %c0_i32, %c0_i32_0, %c0_i32_1 : i32, i32, i32, i32
  }
  func.func @transform_1(%arg0: i32, %arg1: i32) -> (i32, i32) {
    %c0_i32 = arith.constant 0 : i32
    %c0_i32_0 = arith.constant 0 : i32
    %c0_i32_1 = arith.constant 0 : i32
    return %c0_i32, %c0_i32_0 : i32, i32
  }
  func.func @transform_2(%arg0: i32, %arg1: i32) -> (i32, i32) {
    %c0_i32 = arith.constant 0 : i32
    %c0_i32_0 = arith.constant 0 : i32
    %c0_i32_1 = arith.constant 0 : i32
    return %c0_i32, %c0_i32_0 : i32, i32
  }
  func.func @transform_3(%arg0: i32, %arg1: i32) -> (i32, i32) {
    %c0_i32 = arith.constant 0 : i32
    %c0_i32_0 = arith.constant 0 : i32
    %c0_i32_1 = arith.constant 0 : i32
    return %c0_i32, %c0_i32_0 : i32, i32
  }
  func.func @transform_4(%arg0: i32, %arg1: i32) -> (i32, i32, i32) {
    %c0_i32 = arith.constant 0 : i32
    %c0_i32_0 = arith.constant 0 : i32
    %c0_i32_1 = arith.constant 0 : i32
    %c0_i32_2 = arith.constant 0 : i32
    return %c0_i32, %c0_i32_0, %c0_i32_1 : i32, i32, i32
  }
  func.func @transform_5(%arg0: i32, %arg1: i32) -> (i32, i32) {
    %c0_i32 = arith.constant 0 : i32
    %c0_i32_0 = arith.constant 0 : i32
    %c0_i32_1 = arith.constant 0 : i32
    return %c0_i32, %c0_i32_0 : i32, i32
  }
  func.func @transform_6(%arg0: i32, %arg1: i32) -> (i32, i32) {
    %c0_i32 = arith.constant 0 : i32
    %c0_i32_0 = arith.constant 0 : i32
    %c0_i32_1 = arith.constant 0 : i32
    return %c0_i32, %c0_i32_0 : i32, i32
  }
  func.func @transform_7(%arg0: i32, %arg1: i32) -> (i32, i32) {
    %c0_i32 = arith.constant 0 : i32
    %c0_i32_0 = arith.constant 0 : i32
    %c0_i32_1 = arith.constant 0 : i32
    return %c0_i32, %c0_i32_0 : i32, i32
  }
  func.func @transform_8(%arg0: i32, %arg1: i32) -> (i32, i32) {
    %c0_i32 = arith.constant 0 : i32
    %c0_i32_0 = arith.constant 0 : i32
    %c0_i32_1 = arith.constant 0 : i32
    return %c0_i32, %c0_i32_0 : i32, i32
  }
  func.func @transform_9(%arg0: i32, %arg1: i32) -> (i32, i32) {
    %c0_i32 = arith.constant 0 : i32
    %c0_i32_0 = arith.constant 0 : i32
    %c0_i32_1 = arith.constant 0 : i32
    return %c0_i32, %c0_i32_0 : i32, i32
  }
  func.func @transform_10(%arg0: i32, %arg1: i32) -> (i32, i32) {
    %c0_i32 = arith.constant 0 : i32
    %c0_i32_0 = arith.constant 0 : i32
    %c0_i32_1 = arith.constant 0 : i32
    return %c0_i32, %c0_i32_0 : i32, i32
  }
  func.func @transform_11(%arg0: i32, %arg1: i32) -> (i32, i32) {
    %c0_i32 = arith.constant 0 : i32
    %c0_i32_0 = arith.constant 0 : i32
    %c0_i32_1 = arith.constant 0 : i32
    return %c0_i32, %c0_i32_0 : i32, i32
  }
  func.func @transform_12(%arg0: i32, %arg1: i32) -> (i32, i32) {
    %c0_i32 = arith.constant 0 : i32
    %c0_i32_0 = arith.constant 0 : i32
    %c0_i32_1 = arith.constant 0 : i32
    return %c0_i32, %c0_i32_0 : i32, i32
  }
  func.func @transform_13(%arg0: i32, %arg1: i32) -> (i32, i32, i32, i32) {
    %c0_i32 = arith.constant 0 : i32
    %c0_i32_0 = arith.constant 0 : i32
    %c0_i32_1 = arith.constant 0 : i32
    return %arg0, %arg1, %c0_i32, %c0_i32_0 : i32, i32, i32, i32
  }
}

</mosaic_0001>

<llo_original>
// kernel: blk_stride_forward.1
$region0: #{blk_stride_forward.1}
  #allocation0 [shape = 'u32[]', space=smem, size = 0x4, offset = 0x4, fixed_abs, tag = 'smem constant byte address 0x4 - core index']
  #allocation1 [shape = 'u32[144,128]{1,0:T(1,128)}', space=vmem, size = 0x12000, scoped, tag = 'internal scratch']
  %s0 = inlined_call_operand.vmem [shape: bf16[2,18,24,128], index: 0, kind: input, shape index: {}]
  %s1 = inlined_call_operand.vmem [shape: bf16[128,128], index: 1, kind: input, shape index: {}]
  %s2 = inlined_call_operand.vmem [shape: f32[1,128], index: 2, kind: input, shape index: {}]
  %s3 = inlined_call_operand.vmem [shape: f32[1,128], index: 3, kind: input, shape index: {}]
  %s4 = inlined_call_operand.vmem [shape: f32[3,3,128], index: 4, kind: input, shape index: {}]
  %s5 = inlined_call_operand.vmem [shape: f32[1,128], index: 5, kind: input, shape index: {}]
  %s6 = inlined_call_operand.vmem [shape: f32[1,128], index: 6, kind: input, shape index: {}]
  %s7 = inlined_call_operand.vmem [shape: bf16[128,128], index: 7, kind: input, shape index: {}]
  %s8 = inlined_call_operand.vmem [shape: f32[1,128], index: 8, kind: input, shape index: {}]
  %s9 = inlined_call_operand.vmem [shape: f32[1,128], index: 9, kind: input, shape index: {}]
  %s10 = inlined_call_operand.vmem [shape: bf16[128,128], index: 10, kind: input, shape index: {}]
  %s11 = inlined_call_operand.vmem [shape: f32[1,128], index: 11, kind: input, shape index: {}]
  %s12 = inlined_call_operand.vmem [shape: f32[1,128], index: 12, kind: input, shape index: {}]
  %s13 = inlined_call_operand.vmem [shape: f32[2,16,16,128], index: 13, kind: output, shape index: {}]
  %s14 = sld [smem:[#allocation0]]
  $region85: #{blk_stride_forward.1} parent=0
    _
  %s16 = ssub.s32 1, %s14
  %s17 = scalar_select 0, %s16, %s14
  loop: start=0, step=1, limit=6
  $region2: #{blk_stride_forward.1} parent=0 // loop_pre_header
    _
  $region3: #{blk_stride_forward.1} parent=0 // loop_header
    %s19 = sphi 0, %s23
    %p20 = scmp.ge.s32.totalorder %s19, 6
    %s26 = sphi 0, %s38
    %s27 = sphi 0, %s34
    %s28 = sphi 0, %s26
    %s29 = sphi 0, %s27
    %s30 = sphi 0, %s28
    %s31 = sphi 0, %s29
    %s41 = sphi 0, %s43
    %s44 = sphi 0, %s41
    %s45 = sphi 0, %s44
    %s61 = sphi 0, %s45
    %s65 = sphi 0, %s65
    %s67 = sphi 0, %s65
    %s68 = sphi 0, %s67
    %s82 = sphi 0, %s68
    %s86 = sphi 0, %s86
    %s88 = sphi 0, %s86
    %s89 = sphi 0, %s88
    %s103 = sphi 0, %s89
    %s107 = sphi 0, %s107
    %s109 = sphi 0, %s107
    %s110 = sphi 0, %s109
    %s124 = sphi 0, %s110
    %s128 = sphi 0, %s128
    %s130 = sphi 0, %s128
    %s131 = sphi 0, %s130
    %s145 = sphi 0, %s131
    %s149 = sphi 0, %s149
    %s151 = sphi 0, %s149
    %s152 = sphi 0, %s151
    %s166 = sphi 0, %s152
    %s170 = sphi 0, %s170
    %s172 = sphi 0, %s170
    %s173 = sphi 0, %s172
    %s187 = sphi 0, %s173
    %s191 = sphi 0, %s191
    %s193 = sphi 0, %s191
    %s194 = sphi 0, %s193
    %s208 = sphi 0, %s194
    %s212 = sphi 0, %s212
    %s214 = sphi 0, %s212
    %s215 = sphi 0, %s214
    %s229 = sphi 0, %s215
    %s233 = sphi 0, %s233
    %s235 = sphi 0, %s233
    %s236 = sphi 0, %s235
    %s250 = sphi 0, %s236
    %s254 = sphi 0, %s254
    %s256 = sphi 0, %s254
    %s257 = sphi 0, %s256
    %s271 = sphi 0, %s257
    %s275 = sphi 0, %s275
    %s277 = sphi 0, %s275
    %s278 = sphi 0, %s277
    %s292 = sphi 0, %s278
    %s296 = sphi 0, %s296
    %s298 = sphi 0, %s296
    %s299 = sphi 0, %s298
    %s313 = sphi 0, %s299
    %s321 = sphi 0, %s323
    %s324 = sphi 0, %s321
    %s325 = sphi 0, %s324
    %s341 = sphi 0, %s325
  $region4: #{blk_stride_forward.1} parent=0 // loop_header_branch
    %22 = sbr.rel (%p20) target = $region8
  $region5: #{blk_stride_forward.1} parent=0 // loop_body
    %s24 = ssub.s32 %s19, 1
    %s25 = ssub.s32 %s19, 2
    %s32 = sadd.s32 1, %s27
    %p33 = scmp.ge.s32.totalorder %s32, 2
    %s34 = scalar_select %p33, 0, %s32
    %s35 = sadd.s32 1, %s26
    %s36 = scalar_select %p33, %s35, %s26
    %p37 = scmp.ge.s32.totalorder %s36, 2
    %s38 = scalar_select %p37, 0, %s36
    %s39 = ssub.s32 %s26, %s38
    %p40 = scmp.eq.s32.totalorder %s39, 0
    %s42 = sadd.s32 %s41, 1
    %s43 = scalar_select %p40, %s41, %s42
    %p46 = pneg %p40
    %p47 = scmp.eq.s32.totalorder %s19, 3
    %p48 = por %p46, %p47
    %p49 = scmp.ne.s32.totalorder %s41, %s44
    %p50 = scmp.eq.s32.totalorder %s19, 0
    %p51 = por %p49, %p50
    %p52 = scmp.ne.s32.totalorder %s41, %s44
    %p53 = scmp.eq.s32.totalorder %s24, 3
    %p54 = por %p52, %p53
    %p55 = scmp.ne.s32.totalorder %s44, %s45
    %p56 = scmp.eq.s32.totalorder %s24, 0
    %p57 = por %p55, %p56
    %p58 = scmp.ne.s32.totalorder %s44, %s45
    %p59 = scmp.eq.s32.totalorder %s25, 3
    %p60 = por %p58, %p59
    %p62 = scmp.ne.s32.totalorder %s45, %s61
    %p63 = scmp.eq.s32.totalorder %s25, 0
    %p64 = por %p62, %p63
    %s66 = sadd.s32 %s65, 1
    %p69 = scmp.eq.s32.totalorder %s19, 3
    %p70 = scmp.ne.s32.totalorder %s65, %s67
    %p71 = scmp.eq.s32.totalorder %s19, 0
    %p72 = por %p70, %p71
    %p73 = scmp.ne.s32.totalorder %s65, %s67
    %p74 = scmp.eq.s32.totalorder %s24, 3
    %p75 = por %p73, %p74
    %p76 = scmp.ne.s32.totalorder %s67, %s68
    %p77 = scmp.eq.s32.totalorder %s24, 0
    %p78 = por %p76, %p77
    %p79 = scmp.ne.s32.totalorder %s67, %s68
    %p80 = scmp.eq.s32.totalorder %s25, 3
    %p81 = por %p79, %p80
    %p83 = scmp.ne.s32.totalorder %s68, %s82
    %p84 = scmp.eq.s32.totalorder %s25, 0
    %p85 = por %p83, %p84
    %s87 = sadd.s32 %s86, 1
    %p90 = scmp.eq.s32.totalorder %s19, 3
    %p91 = scmp.ne.s32.totalorder %s86, %s88
    %p92 = scmp.eq.s32.totalorder %s19, 0
    %p93 = por %p91, %p92
    %p94 = scmp.ne.s32.totalorder %s86, %s88
    %p95 = scmp.eq.s32.totalorder %s24, 3
    %p96 = por %p94, %p95
    %p97 = scmp.ne.s32.totalorder %s88, %s89
    %p98 = scmp.eq.s32.totalorder %s24, 0
    %p99 = por %p97, %p98
    %p100 = scmp.ne.s32.totalorder %s88, %s89
    %p101 = scmp.eq.s32.totalorder %s25, 3
    %p102 = por %p100, %p101
    %p104 = scmp.ne.s32.totalorder %s89, %s103
    %p105 = scmp.eq.s32.totalorder %s25, 0
    %p106 = por %p104, %p105
    %s108 = sadd.s32 %s107, 1
    %p111 = scmp.eq.s32.totalorder %s19, 3
    %p112 = scmp.ne.s32.totalorder %s107, %s109
    %p113 = scmp.eq.s32.totalorder %s19, 0
    %p114 = por %p112, %p113
    %p115 = scmp.ne.s32.totalorder %s107, %s109
    %p116 = scmp.eq.s32.totalorder %s24, 3
    %p117 = por %p115, %p116
    %p118 = scmp.ne.s32.totalorder %s109, %s110
    %p119 = scmp.eq.s32.totalorder %s24, 0
    %p120 = por %p118, %p119
    %p121 = scmp.ne.s32.totalorder %s109, %s110
    %p122 = scmp.eq.s32.totalorder %s25, 3
    %p123 = por %p121, %p122
    %p125 = scmp.ne.s32.totalorder %s110, %s124
    %p126 = scmp.eq.s32.totalorder %s25, 0
    %p127 = por %p125, %p126
    %s129 = sadd.s32 %s128, 1
    %p132 = scmp.eq.s32.totalorder %s19, 3
    %p133 = scmp.ne.s32.totalorder %s128, %s130
    %p134 = scmp.eq.s32.totalorder %s19, 0
    %p135 = por %p133, %p134
    %p136 = scmp.ne.s32.totalorder %s128, %s130
    %p137 = scmp.eq.s32.totalorder %s24, 3
    %p138 = por %p136, %p137
    %p139 = scmp.ne.s32.totalorder %s130, %s131
    %p140 = scmp.eq.s32.totalorder %s24, 0
    %p141 = por %p139, %p140
    %p142 = scmp.ne.s32.totalorder %s130, %s131
    %p143 = scmp.eq.s32.totalorder %s25, 3
    %p144 = por %p142, %p143
    %p146 = scmp.ne.s32.totalorder %s131, %s145
    %p147 = scmp.eq.s32.totalorder %s25, 0
    %p148 = por %p146, %p147
    %s150 = sadd.s32 %s149, 1
    %p153 = scmp.eq.s32.totalorder %s19, 3
    %p154 = scmp.ne.s32.totalorder %s149, %s151
    %p155 = scmp.eq.s32.totalorder %s19, 0
    %p156 = por %p154, %p155
    %p157 = scmp.ne.s32.totalorder %s149, %s151
    %p158 = scmp.eq.s32.totalorder %s24, 3
    %p159 = por %p157, %p158
    %p160 = scmp.ne.s32.totalorder %s151, %s152
    %p161 = scmp.eq.s32.totalorder %s24, 0
    %p162 = por %p160, %p161
    %p163 = scmp.ne.s32.totalorder %s151, %s152
    %p164 = scmp.eq.s32.totalorder %s25, 3
    %p165 = por %p163, %p164
    %p167 = scmp.ne.s32.totalorder %s152, %s166
    %p168 = scmp.eq.s32.totalorder %s25, 0
    %p169 = por %p167, %p168
    %s171 = sadd.s32 %s170, 1
    %p174 = scmp.eq.s32.totalorder %s19, 3
    %p175 = scmp.ne.s32.totalorder %s170, %s172
    %p176 = scmp.eq.s32.totalorder %s19, 0
    %p177 = por %p175, %p176
    %p178 = scmp.ne.s32.totalorder %s170, %s172
    %p179 = scmp.eq.s32.totalorder %s24, 3
    %p180 = por %p178, %p179
    %p181 = scmp.ne.s32.totalorder %s172, %s173
    %p182 = scmp.eq.s32.totalorder %s24, 0
    %p183 = por %p181, %p182
    %p184 = scmp.ne.s32.totalorder %s172, %s173
    %p185 = scmp.eq.s32.totalorder %s25, 3
    %p186 = por %p184, %p185
    %p188 = scmp.ne.s32.totalorder %s173, %s187
    %p189 = scmp.eq.s32.totalorder %s25, 0
    %p190 = por %p188, %p189
    %s192 = sadd.s32 %s191, 1
    %p195 = scmp.eq.s32.totalorder %s19, 3
    %p196 = scmp.ne.s32.totalorder %s191, %s193
    %p197 = scmp.eq.s32.totalorder %s19, 0
    %p198 = por %p196, %p197
    %p199 = scmp.ne.s32.totalorder %s191, %s193
    %p200 = scmp.eq.s32.totalorder %s24, 3
    %p201 = por %p199, %p200
    %p202 = scmp.ne.s32.totalorder %s193, %s194
    %p203 = scmp.eq.s32.totalorder %s24, 0
    %p204 = por %p202, %p203
    %p205 = scmp.ne.s32.totalorder %s193, %s194
    %p206 = scmp.eq.s32.totalorder %s25, 3
    %p207 = por %p205, %p206
    %p209 = scmp.ne.s32.totalorder %s194, %s208
    %p210 = scmp.eq.s32.totalorder %s25, 0
    %p211 = por %p209, %p210
    %s213 = sadd.s32 %s212, 1
    %p216 = scmp.eq.s32.totalorder %s19, 3
    %p217 = scmp.ne.s32.totalorder %s212, %s214
    %p218 = scmp.eq.s32.totalorder %s19, 0
    %p219 = por %p217, %p218
    %p220 = scmp.ne.s32.totalorder %s212, %s214
    %p221 = scmp.eq.s32.totalorder %s24, 3
    %p222 = por %p220, %p221
    %p223 = scmp.ne.s32.totalorder %s214, %s215
    %p224 = scmp.eq.s32.totalorder %s24, 0
    %p225 = por %p223, %p224
    %p226 = scmp.ne.s32.totalorder %s214, %s215
    %p227 = scmp.eq.s32.totalorder %s25, 3
    %p228 = por %p226, %p227
    %p230 = scmp.ne.s32.totalorder %s215, %s229
    %p231 = scmp.eq.s32.totalorder %s25, 0
    %p232 = por %p230, %p231
    %s234 = sadd.s32 %s233, 1
    %p237 = scmp.eq.s32.totalorder %s19, 3
    %p238 = scmp.ne.s32.totalorder %s233, %s235
    %p239 = scmp.eq.s32.totalorder %s19, 0
    %p240 = por %p238, %p239
    %p241 = scmp.ne.s32.totalorder %s233, %s235
    %p242 = scmp.eq.s32.totalorder %s24, 3
    %p243 = por %p241, %p242
    %p244 = scmp.ne.s32.totalorder %s235, %s236
    %p245 = scmp.eq.s32.totalorder %s24, 0
    %p246 = por %p244, %p245
    %p247 = scmp.ne.s32.totalorder %s235, %s236
    %p248 = scmp.eq.s32.totalorder %s25, 3
    %p249 = por %p247, %p248
    %p251 = scmp.ne.s32.totalorder %s236, %s250
    %p252 = scmp.eq.s32.totalorder %s25, 0
    %p253 = por %p251, %p252
    %s255 = sadd.s32 %s254, 1
    %p258 = scmp.eq.s32.totalorder %s19, 3
    %p259 = scmp.ne.s32.totalorder %s254, %s256
    %p260 = scmp.eq.s32.totalorder %s19, 0
    %p261 = por %p259, %p260
    %p262 = scmp.ne.s32.totalorder %s254, %s256
    %p263 = scmp.eq.s32.totalorder %s24, 3
    %p264 = por %p262, %p263
    %p265 = scmp.ne.s32.totalorder %s256, %s257
    %p266 = scmp.eq.s32.totalorder %s24, 0
    %p267 = por %p265, %p266
    %p268 = scmp.ne.s32.totalorder %s256, %s257
    %p269 = scmp.eq.s32.totalorder %s25, 3
    %p270 = por %p268, %p269
    %p272 = scmp.ne.s32.totalorder %s257, %s271
    %p273 = scmp.eq.s32.totalorder %s25, 0
    %p274 = por %p272, %p273
    %s276 = sadd.s32 %s275, 1
    %p279 = scmp.eq.s32.totalorder %s19, 3
    %p280 = scmp.ne.s32.totalorder %s275, %s277
    %p281 = scmp.eq.s32.totalorder %s19, 0
    %p282 = por %p280, %p281
    %p283 = scmp.ne.s32.totalorder %s275, %s277
    %p284 = scmp.eq.s32.totalorder %s24, 3
    %p285 = por %p283, %p284
    %p286 = scmp.ne.s32.totalorder %s277, %s278
    %p287 = scmp.eq.s32.totalorder %s24, 0
    %p288 = por %p286, %p287
    %p289 = scmp.ne.s32.totalorder %s277, %s278
    %p290 = scmp.eq.s32.totalorder %s25, 3
    %p291 = por %p289, %p290
    %p293 = scmp.ne.s32.totalorder %s278, %s292
    %p294 = scmp.eq.s32.totalorder %s25, 0
    %p295 = por %p293, %p294
    %s297 = sadd.s32 %s296, 1
    %p300 = scmp.eq.s32.totalorder %s19, 3
    %p301 = scmp.ne.s32.totalorder %s296, %s298
    %p302 = scmp.eq.s32.totalorder %s19, 0
    %p303 = por %p301, %p302
    %p304 = scmp.ne.s32.totalorder %s296, %s298
    %p305 = scmp.eq.s32.totalorder %s24, 3
    %p306 = por %p304, %p305
    %p307 = scmp.ne.s32.totalorder %s298, %s299
    %p308 = scmp.eq.s32.totalorder %s24, 0
    %p309 = por %p307, %p308
    %p310 = scmp.ne.s32.totalorder %s298, %s299
    %p311 = scmp.eq.s32.totalorder %s25, 3
    %p312 = por %p310, %p311
    %p314 = scmp.ne.s32.totalorder %s299, %s313
    %p315 = scmp.eq.s32.totalorder %s25, 0
    %p316 = por %p314, %p315
    %s317 = ssub.s32 %s26, %s38
    %s318 = ssub.s32 %s27, %s34
    %s319 = sor.u32 %s317, %s318
    %p320 = scmp.eq.s32.totalorder %s319, 0
    %s322 = sadd.s32 %s321, 1
    %s323 = scalar_select %p320, %s321, %s322
    %p326 = pneg %p320
    %p327 = scmp.eq.s32.totalorder %s19, 3
    %p328 = por %p326, %p327
    %p329 = scmp.ne.s32.totalorder %s321, %s324
    %p330 = scmp.eq.s32.totalorder %s19, 0
    %p331 = por %p329, %p330
    %p332 = scmp.ne.s32.totalorder %s321, %s324
    %p333 = scmp.eq.s32.totalorder %s24, 3
    %p334 = por %p332, %p333
    %p335 = scmp.ne.s32.totalorder %s324, %s325
    %p336 = scmp.eq.s32.totalorder %s24, 0
    %p337 = por %p335, %p336
    %p338 = scmp.ne.s32.totalorder %s324, %s325
    %p339 = scmp.eq.s32.totalorder %s25, 3
    %p340 = por %p338, %p339
    %p342 = scmp.ne.s32.totalorder %s325, %s341
    %p343 = scmp.eq.s32.totalorder %s25, 0
    %p344 = por %p342, %p343
    %p345 = scmp.le.s32.totalorder 1, %s19
    %p346 = scmp.lt.s32.totalorder %s19, 5
    %p347 = pnand %p345, %p346
    %p348 = pneg %p347
    // Predicated region
    $region9: #{blk_stride_forward.1} parent=5 // pred_check
      _
    $region10: #{blk_stride_forward.1} parent=5 // pred_check_branch
      %350 = sbr.rel (%p347) target = $region12
    $region11: #{blk_stride_forward.1} parent=5 // pred_region
      %s351 = ssub.s32 %s19, 1
      // Predicated region
      $region13: #{blk_stride_forward.1} parent=11 // pred_check
        %p352 = pneg %p78
      $region14: #{blk_stride_forward.1} parent=11 // pred_check_branch
        %354 = sbr.rel (%p352) target = $region16
      $region15: #{blk_stride_forward.1} parent=11 // pred_region
        _
      $region16: #{blk_stride_forward.1} parent=11 // pred_fallthru
        _
      // Predicated region
      $region17: #{blk_stride_forward.1} parent=11 // pred_check
        %p355 = pneg %p99
      $region18: #{blk_stride_forward.1} parent=11 // pred_check_branch
        %357 = sbr.rel (%p355) target = $region20
      $region19: #{blk_stride_forward.1} parent=11 // pred_region
        _
      $region20: #{blk_stride_forward.1} parent=11 // pred_fallthru
        _
      // Predicated region
      $region21: #{blk_stride_forward.1} parent=11 // pred_check
        %p358 = pneg %p120
      $region22: #{blk_stride_forward.1} parent=11 // pred_check_branch
        %360 = sbr.rel (%p358) target = $region24
      $region23: #{blk_stride_forward.1} parent=11 // pred_region
        _
      $region24: #{blk_stride_forward.1} parent=11 // pred_fallthru
        _
      // Predicated region
      $region25: #{blk_stride_forward.1} parent=11 // pred_check
        %p361 = pneg %p141
      $region26: #{blk_stride_forward.1} parent=11 // pred_check_branch
        %363 = sbr.rel (%p361) target = $region28
      $region27: #{blk_stride_forward.1} parent=11 // pred_region
        _
      $region28: #{blk_stride_forward.1} parent=11 // pred_fallthru
        _
      // Predicated region
      $region29: #{blk_stride_forward.1} parent=11 // pred_check
        %p364 = pneg %p162
      $region30: #{blk_stride_forward.1} parent=11 // pred_check_branch
        %366 = sbr.rel (%p364) target = $region32
      $region31: #{blk_stride_forward.1} parent=11 // pred_region
        _
      $region32: #{blk_stride_forward.1} parent=11 // pred_fallthru
        _
      // Predicated region
      $region33: #{blk_stride_forward.1} parent=11 // pred_check
        %p367 = pneg %p183
      $region34: #{blk_stride_forward.1} parent=11 // pred_check_branch
        %369 = sbr.rel (%p367) target = $region36
      $region35: #{blk_stride_forward.1} parent=11 // pred_region
        _
      $region36: #{blk_stride_forward.1} parent=11 // pred_fallthru
        _
      // Predicated region
      $region37: #{blk_stride_forward.1} parent=11 // pred_check
        %p370 = pneg %p204
      $region38: #{blk_stride_forward.1} parent=11 // pred_check_branch
        %372 = sbr.rel (%p370) target = $region40
      $region39: #{blk_stride_forward.1} parent=11 // pred_region
        _
      $region40: #{blk_stride_forward.1} parent=11 // pred_fallthru
        _
      // Predicated region
      $region41: #{blk_stride_forward.1} parent=11 // pred_check
        %p373 = pneg %p225
      $region42: #{blk_stride_forward.1} parent=11 // pred_check_branch
        %375 = sbr.rel (%p373) target = $region44
      $region43: #{blk_stride_forward.1} parent=11 // pred_region
        _
      $region44: #{blk_stride_forward.1} parent=11 // pred_fallthru
        _
      // Predicated region
      $region45: #{blk_stride_forward.1} parent=11 // pred_check
        %p376 = pneg %p246
      $region46: #{blk_stride_forward.1} parent=11 // pred_check_branch
        %378 = sbr.rel (%p376) target = $region48
      $region47: #{blk_stride_forward.1} parent=11 // pred_region
        _
      $region48: #{blk_stride_forward.1} parent=11 // pred_fallthru
        _
      // Predicated region
      $region49: #{blk_stride_forward.1} parent=11 // pred_check
        %p379 = pneg %p267
      $region50: #{blk_stride_forward.1} parent=11 // pred_check_branch
        %381 = sbr.rel (%p379) target = $region52
      $region51: #{blk_stride_forward.1} parent=11 // pred_region
        _
      $region52: #{blk_stride_forward.1} parent=11 // pred_fallthru
        _
      // Predicated region
      $region53: #{blk_stride_forward.1} parent=11 // pred_check
        %p382 = pneg %p288
      $region54: #{blk_stride_forward.1} parent=11 // pred_check_branch
        %384 = sbr.rel (%p382) target = $region56
      $region55: #{blk_stride_forward.1} parent=11 // pred_region
        _
      $region56: #{blk_stride_forward.1} parent=11 // pred_fallthru
        _
      // Predicated region
      $region57: #{blk_stride_forward.1} parent=11 // pred_check
        %p385 = pneg %p309
      $region58: #{blk_stride_forward.1} parent=11 // pred_check_branch
        %387 = sbr.rel (%p385) target = $region60
      $region59: #{blk_stride_forward.1} parent=11 // pred_region
        _
      $region60: #{blk_stride_forward.1} parent=11 // pred_fallthru
        _
    $region12: #{blk_stride_forward.1} parent=5 // pred_fallthru
      _
    %p388 = scmp.lt.s32.totalorder %s19, 4
    // Predicated region
    $region61: #{blk_stride_forward.1} parent=5 // pred_check
      %p389 = pneg %p388
    $region62: #{blk_stride_forward.1} parent=5 // pred_check_branch
      %391 = sbr.rel (%p389) target = $region64
    $region63: #{blk_stride_forward.1} parent=5 // pred_region
      // Predicated region
      $region65: #{blk_stride_forward.1} parent=63 // pred_check
        %p392 = pneg %p51
      $region66: #{blk_stride_forward.1} parent=63 // pred_check_branch
        %394 = sbr.rel (%p392) target = $region68
      $region67: #{blk_stride_forward.1} parent=63 // pred_region
        %p395 = scmp.lt.s32.totalorder %s26, 1
        %s396 = scalar_select %p395, %s26, 1
        %s397 = smul.addr %s396, 54
        %s398 = smul.addr %s397, 4
        %s399 = scalar_lea.vmem %s0, %s398
      $region68: #{blk_stride_forward.1} parent=63 // pred_fallthru
        _
    $region64: #{blk_stride_forward.1} parent=5 // pred_fallthru
      _
    %p400 = scmp.le.s32.totalorder 1, %s19
    %p401 = scmp.lt.s32.totalorder %s19, 5
    %p402 = pnand %p400, %p401
    %p403 = pneg %p402
    // Predicated region
    $region69: #{blk_stride_forward.1} parent=5 // pred_check
      _
    $region70: #{blk_stride_forward.1} parent=5 // pred_check_branch
      %405 = sbr.rel (%p402) target = $region72
    $region71: #{blk_stride_forward.1} parent=5 // pred_region
      %s406 = ssub.s32 %s19, 1
      %p407 = scmp.lt.s32.totalorder %s28, 1
      %s408 = scalar_select %p407, %s28, 1
      %s409 = smul.addr %s408, 54
      %s410 = smul.addr %s409, 4
      %s411 = scalar_lea.vmem %s0, %s410
      %p412 = pneg %p57
      %p413 = pneg %p54
      %p414 = pneg %p78
      %p415 = pneg %p75
      %p416 = pneg %p99
      %p417 = pneg %p96
      %p418 = pneg %p120
      %p419 = pneg %p117
      %p420 = pneg %p141
      %p421 = pneg %p138
      %p422 = pneg %p162
      %p423 = pneg %p159
      %p424 = pneg %p183
      %p425 = pneg %p180
      %p426 = pneg %p204
      %p427 = pneg %p201
      %p428 = pneg %p225
      %p429 = pneg %p222
      %p430 = pneg %p246
      %p431 = pneg %p243
      %p432 = pneg %p267
      %p433 = pneg %p264
      %p434 = pneg %p288
      %p435 = pneg %p285
      %p436 = pneg %p309
      %p437 = pneg %p306
      %p438 = pneg %p337
      %p439 = pneg %p334
      %s440 = smul.u32 8, %s29
      %p441 = scmp.lt.s32.totalorder %s28, 1
      %s442 = scalar_select %p441, %s28, 1
      %p443 = scmp.lt.s32.totalorder %s440, 15
      %s444 = scalar_select %p443, %s440, 15
      %s445 = smul.addr %s444, 2
      %s446 = smul.addr %s442, 32
      %s447 = sadd.s32 %s445, %s446
      %s448 = smul.addr %s447, 8
      %s449 = scalar_lea.vmem %s13, %s448
      %p450 = scmp.lt.s32.totalorder %s28, 1
      %s451 = scalar_select %p450, %s28, 1
      %s452 = smul.addr %s451, 54
      %s453 = smul.addr %s452, 4
      %s454 = scalar_lea.vmem %s0, %s453
      %s455 = smul.u32 8, %s29
      %p456 = scmp.lt.s32.totalorder %s28, 1
      %s457 = scalar_select %p456, %s28, 1
      %p458 = scmp.lt.s32.totalorder %s455, 15
      %s459 = scalar_select %p458, %s455, 15
      %s460 = smul.addr %s459, 2
      %s461 = smul.addr %s457, 32
      %s462 = sadd.s32 %s460, %s461
      %s463 = smul.addr %s462, 8
      %s464 = scalar_lea.vmem %s13, %s463
      %s465 = smul.u32 8, %s29
      %s467 = smul.u32 %s29, 8
      %s468 = smul.u32 %s467, 3
      %s469 = smul.addr %s468, 4
      %s470 = scalar_lea.vmem %s454, %s469
      %v471 = vld [vmem:[%s470] sm:$0xf]
      %v472 = vld [vmem:[%s470 + $0x4] sm:$0xf]
      %v473 = vld [vmem:[%s470 + $0x8] sm:$0xf]
      %v474 = vld [vmem:[%s470 + $0xc] sm:$0xf]
      %v475 = vld [vmem:[%s470 + $0x10] sm:$0xf]
      %v476 = vld [vmem:[%s470 + $0x14] sm:$0xf]
      %v477 = vld [vmem:[%s470 + $0x18] sm:$0xf]
      %v478 = vld [vmem:[%s470 + $0x1c] sm:$0xf]
      %v479 = vld [vmem:[%s470 + $0x20] sm:$0xf]
      %v480 = vld [vmem:[%s470 + $0x24] sm:$0xf]
      %v481 = vld [vmem:[%s470 + $0x28] sm:$0xf]
      %v482 = vld [vmem:[%s470 + $0x2c] sm:$0xf]
      %v483 = vld [vmem:[%s470 + $0x30] sm:$0xf]
      %v484 = vld [vmem:[%s470 + $0x34] sm:$0xf]
      %v485 = vld [vmem:[%s470 + $0x38] sm:$0xf]
      %v486 = vld [vmem:[%s470 + $0x3c] sm:$0xf]
      %v487 = vld [vmem:[%s470 + $0x40] sm:$0xf]
      %v488 = vld [vmem:[%s470 + $0x44] sm:$0xf]
      %v489 = vld [vmem:[%s470 + $0x48] sm:$0xf]
      %v490 = vld [vmem:[%s470 + $0x4c] sm:$0xf]
      %v491 = vld [vmem:[%s470 + $0x50] sm:$0xf]
      %v492 = vld [vmem:[%s470 + $0x54] sm:$0xf]
      %v493 = vld [vmem:[%s470 + $0x58] sm:$0xf]
      %v494 = vld [vmem:[%s470 + $0x5c] sm:$0xf]
      %v495 = vld [vmem:[%s470 + $0x60] sm:$0xf]
      %v496 = vld [vmem:[%s470 + $0x64] sm:$0xf]
      %v497 = vld [vmem:[%s470 + $0x68] sm:$0xf]
      %v498 = vld [vmem:[%s470 + $0x6c] sm:$0xf]
      %v499 = vld [vmem:[%s470 + $0x70] sm:$0xf]
      %v500 = vld [vmem:[%s470 + $0x74] sm:$0xf]
      %v501 = vunpack.c.l.bf16 %v471
      %v502 = vunpack.c.l.bf16 %v472
      %v503 = vunpack.c.l.bf16 %v473
      %v504 = vunpack.c.l.bf16 %v474
      %v505 = vunpack.c.l.bf16 %v475
      %v506 = vunpack.c.l.bf16 %v476
      %v507 = vunpack.c.l.bf16 %v477
      %v508 = vunpack.c.l.bf16 %v478
      %v509 = vunpack.c.l.bf16 %v479
      %v510 = vunpack.c.l.bf16 %v480
      %v511 = vunpack.c.l.bf16 %v481
      %v512 = vunpack.c.l.bf16 %v482
      %v513 = vunpack.c.l.bf16 %v483
      %v514 = vunpack.c.l.bf16 %v484
      %v515 = vunpack.c.l.bf16 %v485
      %v516 = vunpack.c.l.bf16 %v486
      %v517 = vunpack.c.l.bf16 %v487
      %v518 = vunpack.c.l.bf16 %v488
      %v519 = vunpack.c.l.bf16 %v489
      %v520 = vunpack.c.l.bf16 %v490
      %v521 = vunpack.c.l.bf16 %v491
      %v522 = vunpack.c.l.bf16 %v492
      %v523 = vunpack.c.l.bf16 %v493
      %v524 = vunpack.c.l.bf16 %v494
      %v525 = vunpack.c.l.bf16 %v495
      %v526 = vunpack.c.l.bf16 %v496
      %v527 = vunpack.c.l.bf16 %v497
      %v528 = vunpack.c.l.bf16 %v498
      %v529 = vunpack.c.l.bf16 %v499
      %v530 = vunpack.c.l.bf16 %v500
      %v531 = vpack.c.bf16 %v502, %v501
      %v532 = vpack.c.bf16 %v504, %v503
      %v533 = vpack.c.bf16 %v506, %v505
      %v534 = vpack.c.bf16 %v508, %v507
      %v535 = vpack.c.bf16 %v510, %v509
      %v536 = vpack.c.bf16 %v512, %v511
      %v537 = vpack.c.bf16 %v514, %v513
      %v538 = vpack.c.bf16 %v516, %v515
      %v539 = vpack.c.bf16 %v518, %v517
      %v540 = vpack.c.bf16 %v520, %v519
      %v541 = vpack.c.bf16 %v522, %v521
      %v542 = vpack.c.bf16 %v524, %v523
      %v543 = vpack.c.bf16 %v526, %v525
      %v544 = vpack.c.bf16 %v528, %v527
      %v545 = vpack.c.bf16 %v530, %v529
      %v546 = vld [vmem:[%s1] sm:$0xf]
      %v547 = vld [vmem:[%s1 + $0x4] sm:$0xf]
      %v548 = vld [vmem:[%s1 + $0x8] sm:$0xf]
      %v549 = vld [vmem:[%s1 + $0xc] sm:$0xf]
      %v550 = vld [vmem:[%s1 + $0x10] sm:$0xf]
      %v551 = vld [vmem:[%s1 + $0x14] sm:$0xf]
      %v552 = vld [vmem:[%s1 + $0x18] sm:$0xf]
      %v553 = vld [vmem:[%s1 + $0x1c] sm:$0xf]
      %v554 = vld [vmem:[%s1 + $0x20] sm:$0xf]
      %v555 = vld [vmem:[%s1 + $0x24] sm:$0xf]
      %v556 = vld [vmem:[%s1 + $0x28] sm:$0xf]
      %v557 = vld [vmem:[%s1 + $0x2c] sm:$0xf]
      %v558 = vld [vmem:[%s1 + $0x30] sm:$0xf]
      %v559 = vld [vmem:[%s1 + $0x34] sm:$0xf]
      %v560 = vld [vmem:[%s1 + $0x38] sm:$0xf]
      %v561 = vld [vmem:[%s1 + $0x3c] sm:$0xf]
      %v578 = vunpack.c.l.b16 %v546
      %v579 = vunpack.c.l.b16 %v547
      %v580 = vunpack.c.l.b16 %v548
      %v581 = vunpack.c.l.b16 %v549
      %v582 = vunpack.c.l.b16 %v550
      %v583 = vunpack.c.l.b16 %v551
      %v584 = vunpack.c.l.b16 %v552
      %v585 = vunpack.c.l.b16 %v553
      %v586 = vunpack.c.l.b16 %v554
      %v587 = vunpack.c.l.b16 %v555
      %v588 = vunpack.c.l.b16 %v556
      %v589 = vunpack.c.l.b16 %v557
      %v590 = vunpack.c.l.b16 %v558
      %v591 = vunpack.c.l.b16 %v559
      %v592 = vunpack.c.l.b16 %v560
      %v593 = vunpack.c.l.b16 %v561
      %v594 = vpack.c.b16 %v579, %v578
      %v595 = vpack.c.b16 %v581, %v580
      %v596 = vpack.c.b16 %v583, %v582
      %v597 = vpack.c.b16 %v585, %v584
      %v598 = vpack.c.b16 %v587, %v586
      %v599 = vpack.c.b16 %v589, %v588
      %v600 = vpack.c.b16 %v591, %v590
      %v601 = vpack.c.b16 %v593, %v592
      %610 = vmatprep.subr.bf16.mxu0 0
      %611 = vmatpush1.bf16.msra.mxu0 %v594
      %612 = vmatprep.subr.bf16.mxu0 0
      %613 = vmatpush1.bf16.msra.mxu0 %v595
      %614 = vmatprep.subr.bf16.mxu0 0
      %615 = vmatpush1.bf16.msra.mxu0 %v596
      %616 = vmatprep.subr.bf16.mxu0 0
      %617 = vmatpush1.bf16.msra.mxu0 %v597
      %618 = vmatprep.subr.bf16.mxu0 0
      %619 = vmatpush1.bf16.msra.mxu0 %v598
      %620 = vmatprep.subr.bf16.mxu0 0
      %621 = vmatpush1.bf16.msra.mxu0 %v599
      %622 = vmatprep.subr.bf16.mxu0 0
      %623 = vmatpush1.bf16.msra.mxu0 %v600
      %624 = vmatprep.subr.bf16.mxu0 0
      %625 = vmatpush1.bf16.msra.mxu0 %v601
      %626 = vmatprep.subr.bf16.mxu0 0
      %627 = vmatpush1.bf16.msra.mxu0 0
      %628 = vmatprep.subr.bf16.mxu0 0
      %629 = vmatpush1.bf16.msra.mxu0 0
      %630 = vmatprep.subr.bf16.mxu0 0
      %631 = vmatpush1.bf16.msra.mxu0 0
      %632 = vmatprep.subr.bf16.mxu0 0
      %633 = vmatpush1.bf16.msra.mxu0 0
      %634 = vmatprep.subr.bf16.mxu0 0
      %635 = vmatpush1.bf16.msra.mxu0 0
      %636 = vmatprep.subr.bf16.mxu0 0
      %637 = vmatpush1.bf16.msra.mxu0 0
      %638 = vmatprep.subr.bf16.mxu0 0
      %639 = vmatpush1.bf16.msra.mxu0 0
      %640 = vmatprep.subr.bf16.mxu0 0
      %641 = vmatpush1.bf16.msra.mxu0 0
      %642 = vmatprep.mubr.bf16.mxu0 0
      %643 = vmatmul.mubr.bf16.gmra.mrb[0].mxu0 %v531
      %v644 = vpop.f32.mrb[0].mxu0
      %v645 = vadd.f32 0.0, %v644
      %v646 = vpop.f32.mrb[0].mxu0
      %v647 = vpop.f32.mrb[0].mxu0
      %v648 = vadd.f32 0.0, %v647
      %v649 = vpop.f32.mrb[0].mxu0
      %650 = vmatprep.mubr.bf16.mxu0 0
      %651 = vmatmul.mubr.bf16.gmra.mrb[0].mxu0 %v532
      %v652 = vpop.f32.mrb[0].mxu0
      %v653 = vadd.f32 0.0, %v652
      %v654 = vpop.f32.mrb[0].mxu0
      %v655 = vpop.f32.mrb[0].mxu0
      %v656 = vadd.f32 0.0, %v655
      %v657 = vpop.f32.mrb[0].mxu0
      %658 = vmatprep.mubr.bf16.mxu0 0
      %659 = vmatmul.mubr.bf16.gmra.mrb[0].mxu0 %v533
      %v660 = vpop.f32.mrb[0].mxu0
      %v661 = vadd.f32 0.0, %v660
      %v662 = vpop.f32.mrb[0].mxu0
      %v663 = vpop.f32.mrb[0].mxu0
      %v664 = vadd.f32 0.0, %v663
      %v665 = vpop.f32.mrb[0].mxu0
      %666 = vmatprep.mubr.bf16.mxu0 0
      %667 = vmatmul.mubr.bf16.gmra.mrb[0].mxu0 %v534
      %v668 = vpop.f32.mrb[0].mxu0
      %v669 = vadd.f32 0.0, %v668
      %v670 = vpop.f32.mrb[0].mxu0
      %v671 = vpop.f32.mrb[0].mxu0
      %v672 = vadd.f32 0.0, %v671
      %v673 = vpop.f32.mrb[0].mxu0
      %674 = vmatprep.mubr.bf16.mxu0 0
      %675 = vmatmul.mubr.bf16.gmra.mrb[0].mxu0 %v535
      %v676 = vpop.f32.mrb[0].mxu0
      %v677 = vadd.f32 0.0, %v676
      %v678 = vpop.f32.mrb[0].mxu0
      %v679 = vpop.f32.mrb[0].mxu0
      %v680 = vadd.f32 0.0, %v679
      %v681 = vpop.f32.mrb[0].mxu0
      %682 = vmatprep.mubr.bf16.mxu0 0
      %683 = vmatmul.mubr.bf16.gmra.mrb[0].mxu0 %v536
      %v684 = vpop.f32.mrb[0].mxu0
      %v685 = vadd.f32 0.0, %v684
      %v686 = vpop.f32.mrb[0].mxu0
      %v687 = vpop.f32.mrb[0].mxu0
      %v688 = vadd.f32 0.0, %v687
      %v689 = vpop.f32.mrb[0].mxu0
      %690 = vmatprep.mubr.bf16.mxu0 0
      %691 = vmatmul.mubr.bf16.gmra.mrb[0].mxu0 %v537
      %v692 = vpop.f32.mrb[0].mxu0
      %v693 = vadd.f32 0.0, %v692
      %v694 = vpop.f32.mrb[0].mxu0
      %v695 = vpop.f32.mrb[0].mxu0
      %v696 = vadd.f32 0.0, %v695
      %v697 = vpop.f32.mrb[0].mxu0
      %698 = vmatprep.mubr.bf16.mxu0 0
      %699 = vmatmul.mubr.bf16.gmra.mrb[0].mxu0 %v538
      %v700 = vpop.f32.mrb[0].mxu0
      %v701 = vadd.f32 0.0, %v700
      %v702 = vpop.f32.mrb[0].mxu0
      %v703 = vpop.f32.mrb[0].mxu0
      %v704 = vadd.f32 0.0, %v703
      %v705 = vpop.f32.mrb[0].mxu0
      %706 = vmatprep.mubr.bf16.mxu0 0
      %707 = vmatmul.mubr.bf16.gmra.mrb[0].mxu0 %v539
      %v708 = vpop.f32.mrb[0].mxu0
      %v709 = vadd.f32 0.0, %v708
      %v710 = vpop.f32.mrb[0].mxu0
      %v711 = vpop.f32.mrb[0].mxu0
      %v712 = vadd.f32 0.0, %v711
      %v713 = vpop.f32.mrb[0].mxu0
      %714 = vmatprep.mubr.bf16.mxu0 0
      %715 = vmatmul.mubr.bf16.gmra.mrb[0].mxu0 %v540
      %v716 = vpop.f32.mrb[0].mxu0
      %v717 = vadd.f32 0.0, %v716
      %v718 = vpop.f32.mrb[0].mxu0
      %v719 = vpop.f32.mrb[0].mxu0
      %v720 = vadd.f32 0.0, %v719
      %v721 = vpop.f32.mrb[0].mxu0
      %722 = vmatprep.mubr.bf16.mxu0 0
      %723 = vmatmul.mubr.bf16.gmra.mrb[0].mxu0 %v541
      %v724 = vpop.f32.mrb[0].mxu0
      %v725 = vadd.f32 0.0, %v724
      %v726 = vpop.f32.mrb[0].mxu0
      %v727 = vpop.f32.mrb[0].mxu0
      %v728 = vadd.f32 0.0, %v727
      %v729 = vpop.f32.mrb[0].mxu0
      %730 = vmatprep.mubr.bf16.mxu0 0
      %731 = vmatmul.mubr.bf16.gmra.mrb[0].mxu0 %v542
      %v732 = vpop.f32.mrb[0].mxu0
      %v733 = vadd.f32 0.0, %v732
      %v734 = vpop.f32.mrb[0].mxu0
      %v735 = vpop.f32.mrb[0].mxu0
      %v736 = vadd.f32 0.0, %v735
      %v737 = vpop.f32.mrb[0].mxu0
      %738 = vmatprep.mubr.bf16.mxu0 0
      %739 = vmatmul.mubr.bf16.gmra.mrb[0].mxu0 %v543
      %v740 = vpop.f32.mrb[0].mxu0
      %v741 = vadd.f32 0.0, %v740
      %v742 = vpop.f32.mrb[0].mxu0
      %v743 = vpop.f32.mrb[0].mxu0
      %v744 = vadd.f32 0.0, %v743
      %v745 = vpop.f32.mrb[0].mxu0
      %746 = vmatprep.mubr.bf16.mxu0 0
      %747 = vmatmul.mubr.bf16.gmra.mrb[0].mxu0 %v544
      %v748 = vpop.f32.mrb[0].mxu0
      %v749 = vadd.f32 0.0, %v748
      %v750 = vpop.f32.mrb[0].mxu0
      %v751 = vpop.f32.mrb[0].mxu0
      %v752 = vadd.f32 0.0, %v751
      %v753 = vpop.f32.mrb[0].mxu0
      %754 = vmatprep.mubr.bf16.mxu0 0
      %755 = vmatmul.mubr.bf16.gmra.mrb[0].mxu0 %v545
      %v756 = vpop.f32.mrb[0].mxu0
      %v757 = vadd.f32 0.0, %v756
      %v758 = vpop.f32.mrb[0].mxu0
      %v759 = vpop.f32.mrb[0].mxu0
      %v760 = vadd.f32 0.0, %v759
      %v761 = vpop.f32.mrb[0].mxu0
      %762 = vdwg.mxu0
      %v763 = vld [vmem:[%s2] sm:$0x1]
      %v765 = vlaneseq
      %v766 = vshrl.u32 %v765, 7
      %v767 = vsub.s32 0, %v766
      %v768 = vrot.slane %v763, %v767
      %v770 = vmul.f32 %v645, %v768
      %v771 = vmul.f32 %v648, %v768
      %v772 = vmul.f32 %v653, %v768
      %v773 = vmul.f32 %v656, %v768
      %v774 = vmul.f32 %v661, %v768
      %v775 = vmul.f32 %v664, %v768
      %v776 = vmul.f32 %v669, %v768
      %v777 = vmul.f32 %v672, %v768
      %v778 = vmul.f32 %v677, %v768
      %v779 = vmul.f32 %v680, %v768
      %v780 = vmul.f32 %v685, %v768
      %v781 = vmul.f32 %v688, %v768
      %v782 = vmul.f32 %v693, %v768
      %v783 = vmul.f32 %v696, %v768
      %v784 = vmul.f32 %v701, %v768
      %v785 = vmul.f32 %v704, %v768
      %v786 = vmul.f32 %v709, %v768
      %v787 = vmul.f32 %v712, %v768
      %v788 = vmul.f32 %v717, %v768
      %v789 = vmul.f32 %v720, %v768
      %v790 = vmul.f32 %v725, %v768
      %v791 = vmul.f32 %v728, %v768
      %v792 = vmul.f32 %v733, %v768
      %v793 = vmul.f32 %v736, %v768
      %v794 = vmul.f32 %v741, %v768
      %v795 = vmul.f32 %v744, %v768
      %v796 = vmul.f32 %v749, %v768
      %v797 = vmul.f32 %v752, %v768
      %v798 = vmul.f32 %v757, %v768
      %v799 = vmul.f32 %v760, %v768
      %v800 = vld [vmem:[%s3] sm:$0x1]
      %v802 = vlaneseq
      %v803 = vshrl.u32 %v802, 7
      %v804 = vsub.s32 0, %v803
      %v805 = vrot.slane %v800, %v804
      %v807 = vadd.f32 %v770, %v805
      %v808 = vadd.f32 %v771, %v805
      %v809 = vadd.f32 %v772, %v805
      %v810 = vadd.f32 %v773, %v805
      %v811 = vadd.f32 %v774, %v805
      %v812 = vadd.f32 %v775, %v805
      %v813 = vadd.f32 %v776, %v805
      %v814 = vadd.f32 %v777, %v805
      %v815 = vadd.f32 %v778, %v805
      %v816 = vadd.f32 %v779, %v805
      %v817 = vadd.f32 %v780, %v805
      %v818 = vadd.f32 %v781, %v805
      %v819 = vadd.f32 %v782, %v805
      %v820 = vadd.f32 %v783, %v805
      %v821 = vadd.f32 %v784, %v805
      %v822 = vadd.f32 %v785, %v805
      %v823 = vadd.f32 %v786, %v805
      %v824 = vadd.f32 %v787, %v805
      %v825 = vadd.f32 %v788, %v805
      %v826 = vadd.f32 %v789, %v805
      %v827 = vadd.f32 %v790, %v805
      %v828 = vadd.f32 %v791, %v805
      %v829 = vadd.f32 %v792, %v805
      %v830 = vadd.f32 %v793, %v805
      %v831 = vadd.f32 %v794, %v805
      %v832 = vadd.f32 %v795, %v805
      %v833 = vadd.f32 %v796, %v805
      %v834 = vadd.f32 %v797, %v805
      %v835 = vadd.f32 %v798, %v805
      %v836 = vadd.f32 %v799, %v805
      %v837 = vmax.f32 %v807, 0.0
      %v838 = vmax.f32 %v808, 0.0
      %v839 = vmax.f32 %v809, 0.0
      %v840 = vmax.f32 %v810, 0.0
      %v841 = vmax.f32 %v811, 0.0
      %v842 = vmax.f32 %v812, 0.0
      %v843 = vmax.f32 %v813, 0.0
      %v844 = vmax.f32 %v814, 0.0
      %v845 = vmax.f32 %v815, 0.0
      %v846 = vmax.f32 %v816, 0.0
      %v847 = vmax.f32 %v817, 0.0
      %v848 = vmax.f32 %v818, 0.0
      %v849 = vmax.f32 %v819, 0.0
      %v850 = vmax.f32 %v820, 0.0
      %v851 = vmax.f32 %v821, 0.0
      %v852 = vmax.f32 %v822, 0.0
      %v853 = vmax.f32 %v823, 0.0
      %v854 = vmax.f32 %v824, 0.0
      %v855 = vmax.f32 %v825, 0.0
      %v856 = vmax.f32 %v826, 0.0
      %v857 = vmax.f32 %v827, 0.0
      %v858 = vmax.f32 %v828, 0.0
      %v859 = vmax.f32 %v829, 0.0
      %v860 = vmax.f32 %v830, 0.0
      %v861 = vmax.f32 %v831, 0.0
      %v862 = vmax.f32 %v832, 0.0
      %v863 = vmax.f32 %v833, 0.0
      %v864 = vmax.f32 %v834, 0.0
      %v865 = vmax.f32 %v835, 0.0
      %v866 = vmax.f32 %v836, 0.0
      %v867 = vmin.f32 %v837, 6.0
      %v868 = vmin.f32 %v838, 6.0
      %v869 = vmin.f32 %v839, 6.0
      %v870 = vmin.f32 %v840, 6.0
      %v871 = vmin.f32 %v841, 6.0
      %v872 = vmin.f32 %v842, 6.0
      %v873 = vmin.f32 %v843, 6.0
      %v874 = vmin.f32 %v844, 6.0
      %v875 = vmin.f32 %v845, 6.0
      %v876 = vmin.f32 %v846, 6.0
      %v877 = vmin.f32 %v847, 6.0
      %v878 = vmin.f32 %v848, 6.0
      %v879 = vmin.f32 %v849, 6.0
      %v880 = vmin.f32 %v850, 6.0
      %v881 = vmin.f32 %v851, 6.0
      %v882 = vmin.f32 %v852, 6.0
      %v883 = vmin.f32 %v853, 6.0
      %v884 = vmin.f32 %v854, 6.0
      %v885 = vmin.f32 %v855, 6.0
      %v886 = vmin.f32 %v856, 6.0
      %v887 = vmin.f32 %v857, 6.0
      %v888 = vmin.f32 %v858, 6.0
      %v889 = vmin.f32 %v859, 6.0
      %v890 = vmin.f32 %v860, 6.0
      %v891 = vmin.f32 %v861, 6.0
      %v892 = vmin.f32 %v862, 6.0
      %v893 = vmin.f32 %v863, 6.0
      %v894 = vmin.f32 %v864, 6.0
      %v895 = vmin.f32 %v865, 6.0
      %v896 = vmin.f32 %v866, 6.0
      %v897 = vstv %s467
      %v898 = vadd.s32 %v897, 1
      %v899 = vadd.s32 %v897, 2
      %v900 = vadd.s32 %v897, 3
      %v901 = vadd.s32 %v897, 4
      %v902 = vadd.s32 %v897, 5
      %v903 = vadd.s32 %v897, 6
      %v904 = vadd.s32 %v897, 7
      %v905 = vadd.s32 %v897, 8
      %v906 = vadd.s32 %v897, 9
      %v907 = vlaneseq
      %v908 = vshrl.u32 %v907, 7
      %v909 = vadd.s32 %v908, 8
      %v910 = vadd.s32 %v908, 16
      %vm911 = vcmp.ge.s32.totalorder %v897, 1
      %vm912 = vcmp.ge.s32.totalorder %v898, 1
      %vm913 = vcmp.ge.s32.totalorder %v899, 1
      %vm914 = vcmp.ge.s32.totalorder %v900, 1
      %vm915 = vcmp.ge.s32.totalorder %v901, 1
      %vm916 = vcmp.ge.s32.totalorder %v902, 1
      %vm917 = vcmp.ge.s32.totalorder %v903, 1
      %vm918 = vcmp.ge.s32.totalorder %v904, 1
      %vm919 = vcmp.ge.s32.totalorder %v905, 1
      %vm920 = vcmp.ge.s32.totalorder %v906, 1
      %vm921 = vcmp.le.s32.totalorder %v897, 16
      %vm922 = vcmp.le.s32.totalorder %v898, 16
      %vm923 = vcmp.le.s32.totalorder %v899, 16
      %vm924 = vcmp.le.s32.totalorder %v900, 16
      %vm925 = vcmp.le.s32.totalorder %v901, 16
      %vm926 = vcmp.le.s32.totalorder %v902, 16
      %vm927 = vcmp.le.s32.totalorder %v903, 16
      %vm928 = vcmp.le.s32.totalorder %v904, 16
      %vm929 = vcmp.le.s32.totalorder %v905, 16
      %vm930 = vcmp.le.s32.totalorder %v906, 16
      %vm931 = vmand %vm911, %vm921
      %vm932 = vmand %vm912, %vm922
      %vm933 = vmand %vm913, %vm923
      %vm934 = vmand %vm914, %vm924
      %vm935 = vmand %vm915, %vm925
      %vm936 = vmand %vm916, %vm926
      %vm937 = vmand %vm917, %vm927
      %vm938 = vmand %vm918, %vm928
      %vm939 = vmand %vm919, %vm929
      %vm940 = vmand %vm920, %vm930
      %vm941 = vcmp.ge.s32.totalorder %v908, 1
      %vm942 = vcmp.ge.s32.totalorder %v909, 1
      %vm943 = vcmp.ge.s32.totalorder %v910, 1
      %vm944 = vmand %vm931, %vm941
      %vm945 = vmand %vm931, %vm942
      %vm946 = vmand %vm931, %vm943
      %vm947 = vmand %vm932, %vm941
      %vm948 = vmand %vm932, %vm942
      %vm949 = vmand %vm932, %vm943
      %vm950 = vmand %vm933, %vm941
      %vm951 = vmand %vm933, %vm942
      %vm952 = vmand %vm933, %vm943
      %vm953 = vmand %vm934, %vm941
      %vm954 = vmand %vm934, %vm942
      %vm955 = vmand %vm934, %vm943
      %vm956 = vmand %vm935, %vm941
      %vm957 = vmand %vm935, %vm942
      %vm958 = vmand %vm935, %vm943
      %vm959 = vmand %vm936, %vm941
      %vm960 = vmand %vm936, %vm942
      %vm961 = vmand %vm936, %vm943
      %vm962 = vmand %vm937, %vm941
      %vm963 = vmand %vm937, %vm942
      %vm964 = vmand %vm937, %vm943
      %vm965 = vmand %vm938, %vm941
      %vm966 = vmand %vm938, %vm942
      %vm967 = vmand %vm938, %vm943
      %vm968 = vmand %vm939, %vm941
      %vm969 = vmand %vm939, %vm942
      %vm970 = vmand %vm939, %vm943
      %vm971 = vmand %vm940, %vm941
      %vm972 = vmand %vm940, %vm942
      %vm973 = vmand %vm940, %vm943
      %vm974 = vcmp.le.s32.totalorder %v908, 16
      %vm975 = vcmp.le.s32.totalorder %v909, 16
      %vm976 = vcmp.le.s32.totalorder %v910, 16
      %vm977 = vmand %vm944, %vm974
      %vm978 = vmand %vm945, %vm975
      %vm979 = vmand %vm946, %vm976
      %vm980 = vmand %vm947, %vm974
      %vm981 = vmand %vm948, %vm975
      %vm982 = vmand %vm949, %vm976
      %vm983 = vmand %vm950, %vm974
      %vm984 = vmand %vm951, %vm975
      %vm985 = vmand %vm952, %vm976
      %vm986 = vmand %vm953, %vm974
      %vm987 = vmand %vm954, %vm975
      %vm988 = vmand %vm955, %vm976
      %vm989 = vmand %vm956, %vm974
      %vm990 = vmand %vm957, %vm975
      %vm991 = vmand %vm958, %vm976
      %vm992 = vmand %vm959, %vm974
      %vm993 = vmand %vm960, %vm975
      %vm994 = vmand %vm961, %vm976
      %vm995 = vmand %vm962, %vm974
      %vm996 = vmand %vm963, %vm975
      %vm997 = vmand %vm964, %vm976
      %vm998 = vmand %vm965, %vm974
      %vm999 = vmand %vm966, %vm975
      %vm1000 = vmand %vm967, %vm976
      %vm1001 = vmand %vm968, %vm974
      %vm1002 = vmand %vm969, %vm975
      %vm1003 = vmand %vm970, %vm976
      %vm1004 = vmand %vm971, %vm974
      %vm1005 = vmand %vm972, %vm975
      %vm1006 = vmand %vm973, %vm976
      %v1007 = vsel %vm977, %v867, 0.0
      %v1008 = vsel %vm978, %v868, 0.0
      %v1009 = vsel %vm979, %v869, 0.0
      %v1010 = vsel %vm980, %v870, 0.0
      %v1011 = vsel %vm981, %v871, 0.0
      %v1012 = vsel %vm982, %v872, 0.0
      %v1013 = vsel %vm983, %v873, 0.0
      %v1014 = vsel %vm984, %v874, 0.0
      %v1015 = vsel %vm985, %v875, 0.0
      %v1016 = vsel %vm986, %v876, 0.0
      %v1017 = vsel %vm987, %v877, 0.0
      %v1018 = vsel %vm988, %v878, 0.0
      %v1019 = vsel %vm989, %v879, 0.0
      %v1020 = vsel %vm990, %v880, 0.0
      %v1021 = vsel %vm991, %v881, 0.0
      %v1022 = vsel %vm992, %v882, 0.0
      %v1023 = vsel %vm993, %v883, 0.0
      %v1024 = vsel %vm994, %v884, 0.0
      %v1025 = vsel %vm995, %v885, 0.0
      %v1026 = vsel %vm996, %v886, 0.0
      %v1027 = vsel %vm997, %v887, 0.0
      %v1028 = vsel %vm998, %v888, 0.0
      %v1029 = vsel %vm999, %v889, 0.0
      %v1030 = vsel %vm1000, %v890, 0.0
      %v1031 = vsel %vm1001, %v891, 0.0
      %v1032 = vsel %vm1002, %v892, 0.0
      %v1033 = vsel %vm1003, %v893, 0.0
      %v1034 = vsel %vm1004, %v894, 0.0
      %v1035 = vsel %vm1005, %v895, 0.0
      %v1036 = vsel %vm1006, %v896, 0.0
      %v1037 = vld [vmem:[%s4] sm:$0x1]
      %v1038 = vlaneseq
      %v1039 = vshrl.u32 %v1038, 7
      %v1040 = vsub.s32 0, %v1039
      %v1041 = vrot.slane %v1037, %v1040
      %v1042 = vmul.f32 %v1007, %v1041
      %v1043 = vmul.f32 %v1008, %v1041
      %v1044 = vmul.f32 %v1010, %v1041
      %v1045 = vmul.f32 %v1011, %v1041
      %v1046 = vmul.f32 %v1013, %v1041
      %v1047 = vmul.f32 %v1014, %v1041
      %v1048 = vmul.f32 %v1016, %v1041
      %v1049 = vmul.f32 %v1017, %v1041
      %v1050 = vmul.f32 %v1019, %v1041
      %v1051 = vmul.f32 %v1020, %v1041
      %v1052 = vmul.f32 %v1022, %v1041
      %v1053 = vmul.f32 %v1023, %v1041
      %v1054 = vmul.f32 %v1025, %v1041
      %v1055 = vmul.f32 %v1026, %v1041
      %v1056 = vmul.f32 %v1028, %v1041
      %v1057 = vmul.f32 %v1029, %v1041
      %v1058 = vadd.f32 %v1042, 0.0
      %v1059 = vadd.f32 %v1043, 0.0
      %v1060 = vadd.f32 %v1044, 0.0
      %v1061 = vadd.f32 %v1045, 0.0
      %v1062 = vadd.f32 %v1046, 0.0
      %v1063 = vadd.f32 %v1047, 0.0
      %v1064 = vadd.f32 %v1048, 0.0
      %v1065 = vadd.f32 %v1049, 0.0
      %v1066 = vadd.f32 %v1050, 0.0
      %v1067 = vadd.f32 %v1051, 0.0
      %v1068 = vadd.f32 %v1052, 0.0
      %v1069 = vadd.f32 %v1053, 0.0
      %v1070 = vadd.f32 %v1054, 0.0
      %v1071 = vadd.f32 %v1055, 0.0
      %v1072 = vadd.f32 %v1056, 0.0
      %v1073 = vadd.f32 %v1057, 0.0
      %v1074 = vld [vmem:[%s4 + $0x1] sm:$0x1]
      %v1075 = vlaneseq
      %v1076 = vshrl.u32 %v1075, 7
      %v1077 = vsub.s32 0, %v1076
      %v1078 = vrot.slane %v1074, %v1077
      %v1079 = vmul.f32 %v1007, %v1078
      %v1080 = vmul.f32 %v1008, %v1078
      %v1081 = vmul.f32 %v1009, %v1078
      %v1082 = vmul.f32 %v1010, %v1078
      %v1083 = vmul.f32 %v1011, %v1078
      %v1084 = vmul.f32 %v1012, %v1078
      %v1085 = vmul.f32 %v1013, %v1078
      %v1086 = vmul.f32 %v1014, %v1078
      %v1087 = vmul.f32 %v1015, %v1078
      %v1088 = vmul.f32 %v1016, %v1078
      %v1089 = vmul.f32 %v1017, %v1078
      %v1090 = vmul.f32 %v1018, %v1078
      %v1091 = vmul.f32 %v1019, %v1078
      %v1092 = vmul.f32 %v1020, %v1078
      %v1093 = vmul.f32 %v1021, %v1078
      %v1094 = vmul.f32 %v1022, %v1078
      %v1095 = vmul.f32 %v1023, %v1078
      %v1096 = vmul.f32 %v1024, %v1078
      %v1097 = vmul.f32 %v1025, %v1078
      %v1098 = vmul.f32 %v1026, %v1078
      %v1099 = vmul.f32 %v1027, %v1078
      %v1100 = vmul.f32 %v1028, %v1078
      %v1101 = vmul.f32 %v1029, %v1078
      %v1102 = vmul.f32 %v1030, %v1078
      %vm1127 = vcmask 1046528
      %v1128 = vrot.slane %v1079, 1
      %v1129 = vrot.slane %v1080, 1
      %v1130 = vsel %vm1127, %v1128, %v1129
      %v1131 = vrot.slane %v1081, 1
      %v1132 = vsel %vm1127, %v1129, %v1131
      %v1133 = vrot.slane %v1082, 1
      %v1134 = vrot.slane %v1083, 1
      %v1135 = vsel %vm1127, %v1133, %v1134
      %v1136 = vrot.slane %v1084, 1
      %v1137 = vsel %vm1127, %v1134, %v1136
      %v1138 = vrot.slane %v1085, 1
      %v1139 = vrot.slane %v1086, 1
      %v1140 = vsel %vm1127, %v1138, %v1139
      %v1141 = vrot.slane %v1087, 1
      %v1142 = vsel %vm1127, %v1139, %v1141
      %v1143 = vrot.slane %v1088, 1
      %v1144 = vrot.slane %v1089, 1
      %v1145 = vsel %vm1127, %v1143, %v1144
      %v1146 = vrot.slane %v1090, 1
      %v1147 = vsel %vm1127, %v1144, %v1146
      %v1148 = vrot.slane %v1091, 1
      %v1149 = vrot.slane %v1092, 1
      %v1150 = vsel %vm1127, %v1148, %v1149
      %v1151 = vrot.slane %v1093, 1
      %v1152 = vsel %vm1127, %v1149, %v1151
      %v1153 = vrot.slane %v1094, 1
      %v1154 = vrot.slane %v1095, 1
      %v1155 = vsel %vm1127, %v1153, %v1154
      %v1156 = vrot.slane %v1096, 1
      %v1157 = vsel %vm1127, %v1154, %v1156
      %v1158 = vrot.slane %v1097, 1
      %v1159 = vrot.slane %v1098, 1
      %v1160 = vsel %vm1127, %v1158, %v1159
      %v1161 = vrot.slane %v1099, 1
      %v1162 = vsel %vm1127, %v1159, %v1161
      %v1163 = vrot.slane %v1100, 1
      %v1164 = vrot.slane %v1101, 1
      %v1165 = vsel %vm1127, %v1163, %v1164
      %v1166 = vrot.slane %v1102, 1
      %v1167 = vsel %vm1127, %v1164, %v1166
      %v1184 = vadd.f32 %v1058, %v1130
      %v1185 = vadd.f32 %v1059, %v1132
      %v1186 = vadd.f32 %v1060, %v1135
      %v1187 = vadd.f32 %v1061, %v1137
      %v1188 = vadd.f32 %v1062, %v1140
      %v1189 = vadd.f32 %v1063, %v1142
      %v1190 = vadd.f32 %v1064, %v1145
      %v1191 = vadd.f32 %v1065, %v1147
      %v1192 = vadd.f32 %v1066, %v1150
      %v1193 = vadd.f32 %v1067, %v1152
      %v1194 = vadd.f32 %v1068, %v1155
      %v1195 = vadd.f32 %v1069, %v1157
      %v1196 = vadd.f32 %v1070, %v1160
      %v1197 = vadd.f32 %v1071, %v1162
      %v1198 = vadd.f32 %v1072, %v1165
      %v1199 = vadd.f32 %v1073, %v1167
      %v1200 = vld [vmem:[%s4 + $0x2] sm:$0x1]
      %v1201 = vlaneseq
      %v1202 = vshrl.u32 %v1201, 7
      %v1203 = vsub.s32 0, %v1202
      %v1204 = vrot.slane %v1200, %v1203
      %v1205 = vmul.f32 %v1007, %v1204
      %v1206 = vmul.f32 %v1008, %v1204
      %v1207 = vmul.f32 %v1009, %v1204
      %v1208 = vmul.f32 %v1010, %v1204
      %v1209 = vmul.f32 %v1011, %v1204
      %v1210 = vmul.f32 %v1012, %v1204
      %v1211 = vmul.f32 %v1013, %v1204
      %v1212 = vmul.f32 %v1014, %v1204
      %v1213 = vmul.f32 %v1015, %v1204
      %v1214 = vmul.f32 %v1016, %v1204
      %v1215 = vmul.f32 %v1017, %v1204
      %v1216 = vmul.f32 %v1018, %v1204
      %v1217 = vmul.f32 %v1019, %v1204
      %v1218 = vmul.f32 %v1020, %v1204
      %v1219 = vmul.f32 %v1021, %v1204
      %v1220 = vmul.f32 %v1022, %v1204
      %v1221 = vmul.f32 %v1023, %v1204
      %v1222 = vmul.f32 %v1024, %v1204
      %v1223 = vmul.f32 %v1025, %v1204
      %v1224 = vmul.f32 %v1026, %v1204
      %v1225 = vmul.f32 %v1027, %v1204
      %v1226 = vmul.f32 %v1028, %v1204
      %v1227 = vmul.f32 %v1029, %v1204
      %v1228 = vmul.f32 %v1030, %v1204
      %vm1253 = vcmask 1045504
      %v1254 = vrot.slane %v1205, 2
      %v1255 = vrot.slane %v1206, 2
      %v1256 = vsel %vm1253, %v1254, %v1255
      %v1257 = vrot.slane %v1207, 2
      %v1258 = vsel %vm1253, %v1255, %v1257
      %v1259 = vrot.slane %v1208, 2
      %v1260 = vrot.slane %v1209, 2
      %v1261 = vsel %vm1253, %v1259, %v1260
      %v1262 = vrot.slane %v1210, 2
      %v1263 = vsel %vm1253, %v1260, %v1262
      %v1264 = vrot.slane %v1211, 2
      %v1265 = vrot.slane %v1212, 2
      %v1266 = vsel %vm1253, %v1264, %v1265
      %v1267 = vrot.slane %v1213, 2
      %v1268 = vsel %vm1253, %v1265, %v1267
      %v1269 = vrot.slane %v1214, 2
      %v1270 = vrot.slane %v1215, 2
      %v1271 = vsel %vm1253, %v1269, %v1270
      %v1272 = vrot.slane %v1216, 2
      %v1273 = vsel %vm1253, %v1270, %v1272
      %v1274 = vrot.slane %v1217, 2
      %v1275 = vrot.slane %v1218, 2
      %v1276 = vsel %vm1253, %v1274, %v1275
      %v1277 = vrot.slane %v1219, 2
      %v1278 = vsel %vm1253, %v1275, %v1277
      %v1279 = vrot.slane %v1220, 2
      %v1280 = vrot.slane %v1221, 2
      %v1281 = vsel %vm1253, %v1279, %v1280
      %v1282 = vrot.slane %v1222, 2
      %v1283 = vsel %vm1253, %v1280, %v1282
      %v1284 = vrot.slane %v1223, 2
      %v1285 = vrot.slane %v1224, 2
      %v1286 = vsel %vm1253, %v1284, %v1285
      %v1287 = vrot.slane %v1225, 2
      %v1288 = vsel %vm1253, %v1285, %v1287
      %v1289 = vrot.slane %v1226, 2
      %v1290 = vrot.slane %v1227, 2
      %v1291 = vsel %vm1253, %v1289, %v1290
      %v1292 = vrot.slane %v1228, 2
      %v1293 = vsel %vm1253, %v1290, %v1292
      %v1310 = vadd.f32 %v1184, %v1256
      %v1311 = vadd.f32 %v1185, %v1258
      %v1312 = vadd.f32 %v1186, %v1261
      %v1313 = vadd.f32 %v1187, %v1263
      %v1314 = vadd.f32 %v1188, %v1266
      %v1315 = vadd.f32 %v1189, %v1268
      %v1316 = vadd.f32 %v1190, %v1271
      %v1317 = vadd.f32 %v1191, %v1273
      %v1318 = vadd.f32 %v1192, %v1276
      %v1319 = vadd.f32 %v1193, %v1278
      %v1320 = vadd.f32 %v1194, %v1281
      %v1321 = vadd.f32 %v1195, %v1283
      %v1322 = vadd.f32 %v1196, %v1286
      %v1323 = vadd.f32 %v1197, %v1288
      %v1324 = vadd.f32 %v1198, %v1291
      %v1325 = vadd.f32 %v1199, %v1293
      %s1326 = scalar_lea.vmem %s4, 4
      %v1327 = vld [vmem:[%s1326] sm:$0x1]
      %v1328 = vlaneseq
      %v1329 = vshrl.u32 %v1328, 7
      %v1330 = vsub.s32 0, %v1329
      %v1331 = vrot.slane %v1327, %v1330
      %v1332 = vmul.f32 %v1010, %v1331
      %v1333 = vmul.f32 %v1011, %v1331
      %v1334 = vmul.f32 %v1013, %v1331
      %v1335 = vmul.f32 %v1014, %v1331
      %v1336 = vmul.f32 %v1016, %v1331
      %v1337 = vmul.f32 %v1017, %v1331
      %v1338 = vmul.f32 %v1019, %v1331
      %v1339 = vmul.f32 %v1020, %v1331
      %v1340 = vmul.f32 %v1022, %v1331
      %v1341 = vmul.f32 %v1023, %v1331
      %v1342 = vmul.f32 %v1025, %v1331
      %v1343 = vmul.f32 %v1026, %v1331
      %v1344 = vmul.f32 %v1028, %v1331
      %v1345 = vmul.f32 %v1029, %v1331
      %v1346 = vmul.f32 %v1031, %v1331
      %v1347 = vmul.f32 %v1032, %v1331
      %v1348 = vadd.f32 %v1310, %v1332
      %v1349 = vadd.f32 %v1311, %v1333
      %v1350 = vadd.f32 %v1312, %v1334
      %v1351 = vadd.f32 %v1313, %v1335
      %v1352 = vadd.f32 %v1314, %v1336
      %v1353 = vadd.f32 %v1315, %v1337
      %v1354 = vadd.f32 %v1316, %v1338
      %v1355 = vadd.f32 %v1317, %v1339
      %v1356 = vadd.f32 %v1318, %v1340
      %v1357 = vadd.f32 %v1319, %v1341
      %v1358 = vadd.f32 %v1320, %v1342
      %v1359 = vadd.f32 %v1321, %v1343
      %v1360 = vadd.f32 %v1322, %v1344
      %v1361 = vadd.f32 %v1323, %v1345
      %v1362 = vadd.f32 %v1324, %v1346
      %v1363 = vadd.f32 %v1325, %v1347
      %v1364 = vld [vmem:[%s1326 + $0x1] sm:$0x1]
      %v1365 = vlaneseq
      %v1366 = vshrl.u32 %v1365, 7
      %v1367 = vsub.s32 0, %v1366
      %v1368 = vrot.slane %v1364, %v1367
      %v1369 = vmul.f32 %v1010, %v1368
      %v1370 = vmul.f32 %v1011, %v1368
      %v1371 = vmul.f32 %v1012, %v1368
      %v1372 = vmul.f32 %v1013, %v1368
      %v1373 = vmul.f32 %v1014, %v1368
      %v1374 = vmul.f32 %v1015, %v1368
      %v1375 = vmul.f32 %v1016, %v1368
      %v1376 = vmul.f32 %v1017, %v1368
      %v1377 = vmul.f32 %v1018, %v1368
      %v1378 = vmul.f32 %v1019, %v1368
      %v1379 = vmul.f32 %v1020, %v1368
      %v1380 = vmul.f32 %v1021, %v1368
      %v1381 = vmul.f32 %v1022, %v1368
      %v1382 = vmul.f32 %v1023, %v1368
      %v1383 = vmul.f32 %v1024, %v1368
      %v1384 = vmul.f32 %v1025, %v1368
      %v1385 = vmul.f32 %v1026, %v1368
      %v1386 = vmul.f32 %v1027, %v1368
      %v1387 = vmul.f32 %v1028, %v1368
      %v1388 = vmul.f32 %v1029, %v1368
      %v1389 = vmul.f32 %v1030, %v1368
      %v1390 = vmul.f32 %v1031, %v1368
      %v1391 = vmul.f32 %v1032, %v1368
      %v1392 = vmul.f32 %v1033, %v1368
      %v1417 = vrot.slane %v1369, 1
      %v1418 = vrot.slane %v1370, 1
      %v1419 = vsel %vm1127, %v1417, %v1418
      %v1420 = vrot.slane %v1371, 1
      %v1421 = vsel %vm1127, %v1418, %v1420
      %v1422 = vrot.slane %v1372, 1
      %v1423 = vrot.slane %v1373, 1
      %v1424 = vsel %vm1127, %v1422, %v1423
      %v1425 = vrot.slane %v1374, 1
      %v1426 = vsel %vm1127, %v1423, %v1425
      %v1427 = vrot.slane %v1375, 1
      %v1428 = vrot.slane %v1376, 1
      %v1429 = vsel %vm1127, %v1427, %v1428
      %v1430 = vrot.slane %v1377, 1
      %v1431 = vsel %vm1127, %v1428, %v1430
      %v1432 = vrot.slane %v1378, 1
      %v1433 = vrot.slane %v1379, 1
      %v1434 = vsel %vm1127, %v1432, %v1433
      %v1435 = vrot.slane %v1380, 1
      %v1436 = vsel %vm1127, %v1433, %v1435
      %v1437 = vrot.slane %v1381, 1
      %v1438 = vrot.slane %v1382, 1
      %v1439 = vsel %vm1127, %v1437, %v1438
      %v1440 = vrot.slane %v1383, 1
      %v1441 = vsel %vm1127, %v1438, %v1440
      %v1442 = vrot.slane %v1384, 1
      %v1443 = vrot.slane %v1385, 1
      %v1444 = vsel %vm1127, %v1442, %v1443
      %v1445 = vrot.slane %v1386, 1
      %v1446 = vsel %vm1127, %v1443, %v1445
      %v1447 = vrot.slane %v1387, 1
      %v1448 = vrot.slane %v1388, 1
      %v1449 = vsel %vm1127, %v1447, %v1448
      %v1450 = vrot.slane %v1389, 1
      %v1451 = vsel %vm1127, %v1448, %v1450
      %v1452 = vrot.slane %v1390, 1
      %v1453 = vrot.slane %v1391, 1
      %v1454 = vsel %vm1127, %v1452, %v1453
      %v1455 = vrot.slane %v1392, 1
      %v1456 = vsel %vm1127, %v1453, %v1455
      %v1473 = vadd.f32 %v1348, %v1419
      %v1474 = vadd.f32 %v1349, %v1421
      %v1475 = vadd.f32 %v1350, %v1424
      %v1476 = vadd.f32 %v1351, %v1426
      %v1477 = vadd.f32 %v1352, %v1429
      %v1478 = vadd.f32 %v1353, %v1431
      %v1479 = vadd.f32 %v1354, %v1434
      %v1480 = vadd.f32 %v1355, %v1436
      %v1481 = vadd.f32 %v1356, %v1439
      %v1482 = vadd.f32 %v1357, %v1441
      %v1483 = vadd.f32 %v1358, %v1444
      %v1484 = vadd.f32 %v1359, %v1446
      %v1485 = vadd.f32 %v1360, %v1449
      %v1486 = vadd.f32 %v1361, %v1451
      %v1487 = vadd.f32 %v1362, %v1454
      %v1488 = vadd.f32 %v1363, %v1456
      %v1489 = vld [vmem:[%s1326 + $0x2] sm:$0x1]
      %v1490 = vlaneseq
      %v1491 = vshrl.u32 %v1490, 7
      %v1492 = vsub.s32 0, %v1491
      %v1493 = vrot.slane %v1489, %v1492
      %v1494 = vmul.f32 %v1010, %v1493
      %v1495 = vmul.f32 %v1011, %v1493
      %v1496 = vmul.f32 %v1012, %v1493
      %v1497 = vmul.f32 %v1013, %v1493
      %v1498 = vmul.f32 %v1014, %v1493
      %v1499 = vmul.f32 %v1015, %v1493
      %v1500 = vmul.f32 %v1016, %v1493
      %v1501 = vmul.f32 %v1017, %v1493
      %v1502 = vmul.f32 %v1018, %v1493
      %v1503 = vmul.f32 %v1019, %v1493
      %v1504 = vmul.f32 %v1020, %v1493
      %v1505 = vmul.f32 %v1021, %v1493
      %v1506 = vmul.f32 %v1022, %v1493
      %v1507 = vmul.f32 %v1023, %v1493
      %v1508 = vmul.f32 %v1024, %v1493
      %v1509 = vmul.f32 %v1025, %v1493
      %v1510 = vmul.f32 %v1026, %v1493
      %v1511 = vmul.f32 %v1027, %v1493
      %v1512 = vmul.f32 %v1028, %v1493
      %v1513 = vmul.f32 %v1029, %v1493
      %v1514 = vmul.f32 %v1030, %v1493
      %v1515 = vmul.f32 %v1031, %v1493
      %v1516 = vmul.f32 %v1032, %v1493
      %v1517 = vmul.f32 %v1033, %v1493
      %v1542 = vrot.slane %v1494, 2
      %v1543 = vrot.slane %v1495, 2
      %v1544 = vsel %vm1253, %v1542, %v1543
      %v1545 = vrot.slane %v1496, 2
      %v1546 = vsel %vm1253, %v1543, %v1545
      %v1547 = vrot.slane %v1497, 2
      %v1548 = vrot.slane %v1498, 2
      %v1549 = vsel %vm1253, %v1547, %v1548
      %v1550 = vrot.slane %v1499, 2
      %v1551 = vsel %vm1253, %v1548, %v1550
      %v1552 = vrot.slane %v1500, 2
      %v1553 = vrot.slane %v1501, 2
      %v1554 = vsel %vm1253, %v1552, %v1553
      %v1555 = vrot.slane %v1502, 2
      %v1556 = vsel %vm1253, %v1553, %v1555
      %v1557 = vrot.slane %v1503, 2
      %v1558 = vrot.slane %v1504, 2
      %v1559 = vsel %vm1253, %v1557, %v1558
      %v1560 = vrot.slane %v1505, 2
      %v1561 = vsel %vm1253, %v1558, %v1560
      %v1562 = vrot.slane %v1506, 2
      %v1563 = vrot.slane %v1507, 2
      %v1564 = vsel %vm1253, %v1562, %v1563
      %v1565 = vrot.slane %v1508, 2
      %v1566 = vsel %vm1253, %v1563, %v1565
      %v1567 = vrot.slane %v1509, 2
      %v1568 = vrot.slane %v1510, 2
      %v1569 = vsel %vm1253, %v1567, %v1568
      %v1570 = vrot.slane %v1511, 2
      %v1571 = vsel %vm1253, %v1568, %v1570
      %v1572 = vrot.slane %v1512, 2
      %v1573 = vrot.slane %v1513, 2
      %v1574 = vsel %vm1253, %v1572, %v1573
      %v1575 = vrot.slane %v1514, 2
      %v1576 = vsel %vm1253, %v1573, %v1575
      %v1577 = vrot.slane %v1515, 2
      %v1578 = vrot.slane %v1516, 2
      %v1579 = vsel %vm1253, %v1577, %v1578
      %v1580 = vrot.slane %v1517, 2
      %v1581 = vsel %vm1253, %v1578, %v1580
      %v1598 = vadd.f32 %v1473, %v1544
      %v1599 = vadd.f32 %v1474, %v1546
      %v1600 = vadd.f32 %v1475, %v1549
      %v1601 = vadd.f32 %v1476, %v1551
      %v1602 = vadd.f32 %v1477, %v1554
      %v1603 = vadd.f32 %v1478, %v1556
      %v1604 = vadd.f32 %v1479, %v1559
      %v1605 = vadd.f32 %v1480, %v1561
      %v1606 = vadd.f32 %v1481, %v1564
      %v1607 = vadd.f32 %v1482, %v1566
      %v1608 = vadd.f32 %v1483, %v1569
      %v1609 = vadd.f32 %v1484, %v1571
      %v1610 = vadd.f32 %v1485, %v1574
      %v1611 = vadd.f32 %v1486, %v1576
      %v1612 = vadd.f32 %v1487, %v1579
      %v1613 = vadd.f32 %v1488, %v1581
      %s1614 = scalar_lea.vmem %s4, 8
      %v1615 = vld [vmem:[%s1614] sm:$0x1]
      %v1616 = vlaneseq
      %v1617 = vshrl.u32 %v1616, 7
      %v1618 = vsub.s32 0, %v1617
      %v1619 = vrot.slane %v1615, %v1618
      %v1620 = vmul.f32 %v1013, %v1619
      %v1621 = vmul.f32 %v1014, %v1619
      %v1622 = vmul.f32 %v1016, %v1619
      %v1623 = vmul.f32 %v1017, %v1619
      %v1624 = vmul.f32 %v1019, %v1619
      %v1625 = vmul.f32 %v1020, %v1619
      %v1626 = vmul.f32 %v1022, %v1619
      %v1627 = vmul.f32 %v1023, %v1619
      %v1628 = vmul.f32 %v1025, %v1619
      %v1629 = vmul.f32 %v1026, %v1619
      %v1630 = vmul.f32 %v1028, %v1619
      %v1631 = vmul.f32 %v1029, %v1619
      %v1632 = vmul.f32 %v1031, %v1619
      %v1633 = vmul.f32 %v1032, %v1619
      %v1634 = vmul.f32 %v1034, %v1619
      %v1635 = vmul.f32 %v1035, %v1619
      %v1636 = vadd.f32 %v1598, %v1620
      %v1637 = vadd.f32 %v1599, %v1621
      %v1638 = vadd.f32 %v1600, %v1622
      %v1639 = vadd.f32 %v1601, %v1623
      %v1640 = vadd.f32 %v1602, %v1624
      %v1641 = vadd.f32 %v1603, %v1625
      %v1642 = vadd.f32 %v1604, %v1626
      %v1643 = vadd.f32 %v1605, %v1627
      %v1644 = vadd.f32 %v1606, %v1628
      %v1645 = vadd.f32 %v1607, %v1629
      %v1646 = vadd.f32 %v1608, %v1630
      %v1647 = vadd.f32 %v1609, %v1631
      %v1648 = vadd.f32 %v1610, %v1632
      %v1649 = vadd.f32 %v1611, %v1633
      %v1650 = vadd.f32 %v1612, %v1634
      %v1651 = vadd.f32 %v1613, %v1635
      %v1652 = vld [vmem:[%s1614 + $0x1] sm:$0x1]
      %v1653 = vlaneseq
      %v1654 = vshrl.u32 %v1653, 7
      %v1655 = vsub.s32 0, %v1654
      %v1656 = vrot.slane %v1652, %v1655
      %v1657 = vmul.f32 %v1013, %v1656
      %v1658 = vmul.f32 %v1014, %v1656
      %v1659 = vmul.f32 %v1015, %v1656
      %v1660 = vmul.f32 %v1016, %v1656
      %v1661 = vmul.f32 %v1017, %v1656
      %v1662 = vmul.f32 %v1018, %v1656
      %v1663 = vmul.f32 %v1019, %v1656
      %v1664 = vmul.f32 %v1020, %v1656
      %v1665 = vmul.f32 %v1021, %v1656
      %v1666 = vmul.f32 %v1022, %v1656
      %v1667 = vmul.f32 %v1023, %v1656
      %v1668 = vmul.f32 %v1024, %v1656
      %v1669 = vmul.f32 %v1025, %v1656
      %v1670 = vmul.f32 %v1026, %v1656
      %v1671 = vmul.f32 %v1027, %v1656
      %v1672 = vmul.f32 %v1028, %v1656
      %v1673 = vmul.f32 %v1029, %v1656
      %v1674 = vmul.f32 %v1030, %v1656
      %v1675 = vmul.f32 %v1031, %v1656
      %v1676 = vmul.f32 %v1032, %v1656
      %v1677 = vmul.f32 %v1033, %v1656
      %v1678 = vmul.f32 %v1034, %v1656
      %v1679 = vmul.f32 %v1035, %v1656
      %v1680 = vmul.f32 %v1036, %v1656
      %v1705 = vrot.slane %v1657, 1
      %v1706 = vrot.slane %v1658, 1
      %v1707 = vsel %vm1127, %v1705, %v1706
      %v1708 = vrot.slane %v1659, 1
      %v1709 = vsel %vm1127, %v1706, %v1708
      %v1710 = vrot.slane %v1660, 1
      %v1711 = vrot.slane %v1661, 1
      %v1712 = vsel %vm1127, %v1710, %v1711
      %v1713 = vrot.slane %v1662, 1
      %v1714 = vsel %vm1127, %v1711, %v1713
      %v1715 = vrot.slane %v1663, 1
      %v1716 = vrot.slane %v1664, 1
      %v1717 = vsel %vm1127, %v1715, %v1716
      %v1718 = vrot.slane %v1665, 1
      %v1719 = vsel %vm1127, %v1716, %v1718
      %v1720 = vrot.slane %v1666, 1
      %v1721 = vrot.slane %v1667, 1
      %v1722 = vsel %vm1127, %v1720, %v1721
      %v1723 = vrot.slane %v1668, 1
      %v1724 = vsel %vm1127, %v1721, %v1723
      %v1725 = vrot.slane %v1669, 1
      %v1726 = vrot.slane %v1670, 1
      %v1727 = vsel %vm1127, %v1725, %v1726
      %v1728 = vrot.slane %v1671, 1
      %v1729 = vsel %vm1127, %v1726, %v1728
      %v1730 = vrot.slane %v1672, 1
      %v1731 = vrot.slane %v1673, 1
      %v1732 = vsel %vm1127, %v1730, %v1731
      %v1733 = vrot.slane %v1674, 1
      %v1734 = vsel %vm1127, %v1731, %v1733
      %v1735 = vrot.slane %v1675, 1
      %v1736 = vrot.slane %v1676, 1
      %v1737 = vsel %vm1127, %v1735, %v1736
      %v1738 = vrot.slane %v1677, 1
      %v1739 = vsel %vm1127, %v1736, %v1738
      %v1740 = vrot.slane %v1678, 1
      %v1741 = vrot.slane %v1679, 1
      %v1742 = vsel %vm1127, %v1740, %v1741
      %v1743 = vrot.slane %v1680, 1
      %v1744 = vsel %vm1127, %v1741, %v1743
      %v1761 = vadd.f32 %v1636, %v1707
      %v1762 = vadd.f32 %v1637, %v1709
      %v1763 = vadd.f32 %v1638, %v1712
      %v1764 = vadd.f32 %v1639, %v1714
      %v1765 = vadd.f32 %v1640, %v1717
      %v1766 = vadd.f32 %v1641, %v1719
      %v1767 = vadd.f32 %v1642, %v1722
      %v1768 = vadd.f32 %v1643, %v1724
      %v1769 = vadd.f32 %v1644, %v1727
      %v1770 = vadd.f32 %v1645, %v1729
      %v1771 = vadd.f32 %v1646, %v1732
      %v1772 = vadd.f32 %v1647, %v1734
      %v1773 = vadd.f32 %v1648, %v1737
      %v1774 = vadd.f32 %v1649, %v1739
      %v1775 = vadd.f32 %v1650, %v1742
      %v1776 = vadd.f32 %v1651, %v1744
      %v1777 = vld [vmem:[%s1614 + $0x2] sm:$0x1]
      %v1778 = vlaneseq
      %v1779 = vshrl.u32 %v1778, 7
      %v1780 = vsub.s32 0, %v1779
      %v1781 = vrot.slane %v1777, %v1780
      %v1782 = vmul.f32 %v1013, %v1781
      %v1783 = vmul.f32 %v1014, %v1781
      %v1784 = vmul.f32 %v1015, %v1781
      %v1785 = vmul.f32 %v1016, %v1781
      %v1786 = vmul.f32 %v1017, %v1781
      %v1787 = vmul.f32 %v1018, %v1781
      %v1788 = vmul.f32 %v1019, %v1781
      %v1789 = vmul.f32 %v1020, %v1781
      %v1790 = vmul.f32 %v1021, %v1781
      %v1791 = vmul.f32 %v1022, %v1781
      %v1792 = vmul.f32 %v1023, %v1781
      %v1793 = vmul.f32 %v1024, %v1781
      %v1794 = vmul.f32 %v1025, %v1781
      %v1795 = vmul.f32 %v1026, %v1781
      %v1796 = vmul.f32 %v1027, %v1781
      %v1797 = vmul.f32 %v1028, %v1781
      %v1798 = vmul.f32 %v1029, %v1781
      %v1799 = vmul.f32 %v1030, %v1781
      %v1800 = vmul.f32 %v1031, %v1781
      %v1801 = vmul.f32 %v1032, %v1781
      %v1802 = vmul.f32 %v1033, %v1781
      %v1803 = vmul.f32 %v1034, %v1781
      %v1804 = vmul.f32 %v1035, %v1781
      %v1805 = vmul.f32 %v1036, %v1781
      %v1830 = vrot.slane %v1782, 2
      %v1831 = vrot.slane %v1783, 2
      %v1832 = vsel %vm1253, %v1830, %v1831
      %v1833 = vrot.slane %v1784, 2
      %v1834 = vsel %vm1253, %v1831, %v1833
      %v1835 = vrot.slane %v1785, 2
      %v1836 = vrot.slane %v1786, 2
      %v1837 = vsel %vm1253, %v1835, %v1836
      %v1838 = vrot.slane %v1787, 2
      %v1839 = vsel %vm1253, %v1836, %v1838
      %v1840 = vrot.slane %v1788, 2
      %v1841 = vrot.slane %v1789, 2
      %v1842 = vsel %vm1253, %v1840, %v1841
      %v1843 = vrot.slane %v1790, 2
      %v1844 = vsel %vm1253, %v1841, %v1843
      %v1845 = vrot.slane %v1791, 2
      %v1846 = vrot.slane %v1792, 2
      %v1847 = vsel %vm1253, %v1845, %v1846
      %v1848 = vrot.slane %v1793, 2
      %v1849 = vsel %vm1253, %v1846, %v1848
      %v1850 = vrot.slane %v1794, 2
      %v1851 = vrot.slane %v1795, 2
      %v1852 = vsel %vm1253, %v1850, %v1851
      %v1853 = vrot.slane %v1796, 2
      %v1854 = vsel %vm1253, %v1851, %v1853
      %v1855 = vrot.slane %v1797, 2
      %v1856 = vrot.slane %v1798, 2
      %v1857 = vsel %vm1253, %v1855, %v1856
      %v1858 = vrot.slane %v1799, 2
      %v1859 = vsel %vm1253, %v1856, %v1858
      %v1860 = vrot.slane %v1800, 2
      %v1861 = vrot.slane %v1801, 2
      %v1862 = vsel %vm1253, %v1860, %v1861
      %v1863 = vrot.slane %v1802, 2
      %v1864 = vsel %vm1253, %v1861, %v1863
      %v1865 = vrot.slane %v1803, 2
      %v1866 = vrot.slane %v1804, 2
      %v1867 = vsel %vm1253, %v1865, %v1866
      %v1868 = vrot.slane %v1805, 2
      %v1869 = vsel %vm1253, %v1866, %v1868
      %v1886 = vadd.f32 %v1761, %v1832
      %v1887 = vadd.f32 %v1762, %v1834
      %v1888 = vadd.f32 %v1763, %v1837
      %v1889 = vadd.f32 %v1764, %v1839
      %v1890 = vadd.f32 %v1765, %v1842
      %v1891 = vadd.f32 %v1766, %v1844
      %v1892 = vadd.f32 %v1767, %v1847
      %v1893 = vadd.f32 %v1768, %v1849
      %v1894 = vadd.f32 %v1769, %v1852
      %v1895 = vadd.f32 %v1770, %v1854
      %v1896 = vadd.f32 %v1771, %v1857
      %v1897 = vadd.f32 %v1772, %v1859
      %v1898 = vadd.f32 %v1773, %v1862
      %v1899 = vadd.f32 %v1774, %v1864
      %v1900 = vadd.f32 %v1775, %v1867
      %v1901 = vadd.f32 %v1776, %v1869
      %v1902 = vld [vmem:[%s5] sm:$0x1]
      %v1904 = vlaneseq
      %v1905 = vshrl.u32 %v1904, 7
      %v1906 = vsub.s32 0, %v1905
      %v1907 = vrot.slane %v1902, %v1906
      %v1909 = vmul.f32 %v1886, %v1907
      %v1910 = vmul.f32 %v1887, %v1907
      %v1911 = vmul.f32 %v1888, %v1907
      %v1912 = vmul.f32 %v1889, %v1907
      %v1913 = vmul.f32 %v1890, %v1907
      %v1914 = vmul.f32 %v1891, %v1907
      %v1915 = vmul.f32 %v1892, %v1907
      %v1916 = vmul.f32 %v1893, %v1907
      %v1917 = vmul.f32 %v1894, %v1907
      %v1918 = vmul.f32 %v1895, %v1907
      %v1919 = vmul.f32 %v1896, %v1907
      %v1920 = vmul.f32 %v1897, %v1907
      %v1921 = vmul.f32 %v1898, %v1907
      %v1922 = vmul.f32 %v1899, %v1907
      %v1923 = vmul.f32 %v1900, %v1907
      %v1924 = vmul.f32 %v1901, %v1907
      %v1925 = vld [vmem:[%s6] sm:$0x1]
      %v1927 = vlaneseq
      %v1928 = vshrl.u32 %v1927, 7
      %v1929 = vsub.s32 0, %v1928
      %v1930 = vrot.slane %v1925, %v1929
      %v1932 = vadd.f32 %v1909, %v1930
      %v1933 = vadd.f32 %v1910, %v1930
      %v1934 = vadd.f32 %v1911, %v1930
      %v1935 = vadd.f32 %v1912, %v1930
      %v1936 = vadd.f32 %v1913, %v1930
      %v1937 = vadd.f32 %v1914, %v1930
      %v1938 = vadd.f32 %v1915, %v1930
      %v1939 = vadd.f32 %v1916, %v1930
      %v1940 = vadd.f32 %v1917, %v1930
      %v1941 = vadd.f32 %v1918, %v1930
      %v1942 = vadd.f32 %v1919, %v1930
      %v1943 = vadd.f32 %v1920, %v1930
      %v1944 = vadd.f32 %v1921, %v1930
      %v1945 = vadd.f32 %v1922, %v1930
      %v1946 = vadd.f32 %v1923, %v1930
      %v1947 = vadd.f32 %v1924, %v1930
      %v1948 = vmax.f32 %v1932, 0.0
      %v1949 = vmax.f32 %v1933, 0.0
      %v1950 = vmax.f32 %v1934, 0.0
      %v1951 = vmax.f32 %v1935, 0.0
      %v1952 = vmax.f32 %v1936, 0.0
      %v1953 = vmax.f32 %v1937, 0.0
      %v1954 = vmax.f32 %v1938, 0.0
      %v1955 = vmax.f32 %v1939, 0.0
      %v1956 = vmax.f32 %v1940, 0.0
      %v1957 = vmax.f32 %v1941, 0.0
      %v1958 = vmax.f32 %v1942, 0.0
      %v1959 = vmax.f32 %v1943, 0.0
      %v1960 = vmax.f32 %v1944, 0.0
      %v1961 = vmax.f32 %v1945, 0.0
      %v1962 = vmax.f32 %v1946, 0.0
      %v1963 = vmax.f32 %v1947, 0.0
      %v1964 = vmin.f32 %v1948, 6.0
      %v1965 = vmin.f32 %v1949, 6.0
      %v1966 = vmin.f32 %v1950, 6.0
      %v1967 = vmin.f32 %v1951, 6.0
      %v1968 = vmin.f32 %v1952, 6.0
      %v1969 = vmin.f32 %v1953, 6.0
      %v1970 = vmin.f32 %v1954, 6.0
      %v1971 = vmin.f32 %v1955, 6.0
      %v1972 = vmin.f32 %v1956, 6.0
      %v1973 = vmin.f32 %v1957, 6.0
      %v1974 = vmin.f32 %v1958, 6.0
      %v1975 = vmin.f32 %v1959, 6.0
      %v1976 = vmin.f32 %v1960, 6.0
      %v1977 = vmin.f32 %v1961, 6.0
      %v1978 = vmin.f32 %v1962, 6.0
      %v1979 = vmin.f32 %v1963, 6.0
      %v1980 = vpack.c.bf16 %v1965, %v1964
      %v1981 = vpack.c.bf16 %v1967, %v1966
      %v1982 = vpack.c.bf16 %v1969, %v1968
      %v1983 = vpack.c.bf16 %v1971, %v1970
      %v1984 = vpack.c.bf16 %v1973, %v1972
      %v1985 = vpack.c.bf16 %v1975, %v1974
      %v1986 = vpack.c.bf16 %v1977, %v1976
      %v1987 = vpack.c.bf16 %v1979, %v1978
      %v1988 = vld [vmem:[%s7] sm:$0xf]
      %v1989 = vld [vmem:[%s7 + $0x4] sm:$0xf]
      %v1990 = vld [vmem:[%s7 + $0x8] sm:$0xf]
      %v1991 = vld [vmem:[%s7 + $0xc] sm:$0xf]
      %v1992 = vld [vmem:[%s7 + $0x10] sm:$0xf]
      %v1993 = vld [vmem:[%s7 + $0x14] sm:$0xf]
      %v1994 = vld [vmem:[%s7 + $0x18] sm:$0xf]
      %v1995 = vld [vmem:[%s7 + $0x1c] sm:$0xf]
      %v1996 = vld [vmem:[%s7 + $0x20] sm:$0xf]
      %v1997 = vld [vmem:[%s7 + $0x24] sm:$0xf]
      %v1998 = vld [vmem:[%s7 + $0x28] sm:$0xf]
      %v1999 = vld [vmem:[%s7 + $0x2c] sm:$0xf]
      %v2000 = vld [vmem:[%s7 + $0x30] sm:$0xf]
      %v2001 = vld [vmem:[%s7 + $0x34] sm:$0xf]
      %v2002 = vld [vmem:[%s7 + $0x38] sm:$0xf]
      %v2003 = vld [vmem:[%s7 + $0x3c] sm:$0xf]
      %v2020 = vunpack.c.l.b16 %v1988
      %v2021 = vunpack.c.l.b16 %v1989
      %v2022 = vunpack.c.l.b16 %v1990
      %v2023 = vunpack.c.l.b16 %v1991
      %v2024 = vunpack.c.l.b16 %v1992
      %v2025 = vunpack.c.l.b16 %v1993
      %v2026 = vunpack.c.l.b16 %v1994
      %v2027 = vunpack.c.l.b16 %v1995
      %v2028 = vunpack.c.l.b16 %v1996
      %v2029 = vunpack.c.l.b16 %v1997
      %v2030 = vunpack.c.l.b16 %v1998
      %v2031 = vunpack.c.l.b16 %v1999
      %v2032 = vunpack.c.l.b16 %v2000
      %v2033 = vunpack.c.l.b16 %v2001
      %v2034 = vunpack.c.l.b16 %v2002
      %v2035 = vunpack.c.l.b16 %v2003
      %v2036 = vpack.c.b16 %v2021, %v2020
      %v2037 = vpack.c.b16 %v2023, %v2022
      %v2038 = vpack.c.b16 %v2025, %v2024
      %v2039 = vpack.c.b16 %v2027, %v2026
      %v2040 = vpack.c.b16 %v2029, %v2028
      %v2041 = vpack.c.b16 %v2031, %v2030
      %v2042 = vpack.c.b16 %v2033, %v2032
      %v2043 = vpack.c.b16 %v2035, %v2034
      %2052 = vmatprep.subr.bf16.mxu0 0
      %2053 = vmatpush1.bf16.msra.mxu0 %v2036
      %2054 = vmatprep.subr.bf16.mxu0 0
      %2055 = vmatpush1.bf16.msra.mxu0 %v2037
      %2056 = vmatprep.subr.bf16.mxu0 0
      %2057 = vmatpush1.bf16.msra.mxu0 %v2038
      %2058 = vmatprep.subr.bf16.mxu0 0
      %2059 = vmatpush1.bf16.msra.mxu0 %v2039
      %2060 = vmatprep.subr.bf16.mxu0 0
      %2061 = vmatpush1.bf16.msra.mxu0 %v2040
      %2062 = vmatprep.subr.bf16.mxu0 0
      %2063 = vmatpush1.bf16.msra.mxu0 %v2041
      %2064 = vmatprep.subr.bf16.mxu0 0
      %2065 = vmatpush1.bf16.msra.mxu0 %v2042
      %2066 = vmatprep.subr.bf16.mxu0 0
      %2067 = vmatpush1.bf16.msra.mxu0 %v2043
      %2068 = vmatprep.subr.bf16.mxu0 0
      %2069 = vmatpush1.bf16.msra.mxu0 0
      %2070 = vmatprep.subr.bf16.mxu0 0
      %2071 = vmatpush1.bf16.msra.mxu0 0
      %2072 = vmatprep.subr.bf16.mxu0 0
      %2073 = vmatpush1.bf16.msra.mxu0 0
      %2074 = vmatprep.subr.bf16.mxu0 0
      %2075 = vmatpush1.bf16.msra.mxu0 0
      %2076 = vmatprep.subr.bf16.mxu0 0
      %2077 = vmatpush1.bf16.msra.mxu0 0
      %2078 = vmatprep.subr.bf16.mxu0 0
      %2079 = vmatpush1.bf16.msra.mxu0 0
      %2080 = vmatprep.subr.bf16.mxu0 0
      %2081 = vmatpush1.bf16.msra.mxu0 0
      %2082 = vmatprep.subr.bf16.mxu0 0
      %2083 = vmatpush1.bf16.msra.mxu0 0
      %2084 = vmatprep.mubr.bf16.mxu0 0
      %2085 = vmatmul.mubr.bf16.gmra.mrb[0].mxu0 %v1980
      %v2086 = vpop.f32.mrb[0].mxu0
      %v2087 = vadd.f32 0.0, %v2086
      %v2088 = vpop.f32.mrb[0].mxu0
      %v2089 = vpop.f32.mrb[0].mxu0
      %v2090 = vadd.f32 0.0, %v2089
      %v2091 = vpop.f32.mrb[0].mxu0
      %2092 = vmatprep.mubr.bf16.mxu0 0
      %2093 = vmatmul.mubr.bf16.gmra.mrb[0].mxu0 %v1981
      %v2094 = vpop.f32.mrb[0].mxu0
      %v2095 = vadd.f32 0.0, %v2094
      %v2096 = vpop.f32.mrb[0].mxu0
      %v2097 = vpop.f32.mrb[0].mxu0
      %v2098 = vadd.f32 0.0, %v2097
      %v2099 = vpop.f32.mrb[0].mxu0
      %2100 = vmatprep.mubr.bf16.mxu0 0
      %2101 = vmatmul.mubr.bf16.gmra.mrb[0].mxu0 %v1982
      %v2102 = vpop.f32.mrb[0].mxu0
      %v2103 = vadd.f32 0.0, %v2102
      %v2104 = vpop.f32.mrb[0].mxu0
      %v2105 = vpop.f32.mrb[0].mxu0
      %v2106 = vadd.f32 0.0, %v2105
      %v2107 = vpop.f32.mrb[0].mxu0
      %2108 = vmatprep.mubr.bf16.mxu0 0
      %2109 = vmatmul.mubr.bf16.gmra.mrb[0].mxu0 %v1983
      %v2110 = vpop.f32.mrb[0].mxu0
      %v2111 = vadd.f32 0.0, %v2110
      %v2112 = vpop.f32.mrb[0].mxu0
      %v2113 = vpop.f32.mrb[0].mxu0
      %v2114 = vadd.f32 0.0, %v2113
      %v2115 = vpop.f32.mrb[0].mxu0
      %2116 = vmatprep.mubr.bf16.mxu0 0
      %2117 = vmatmul.mubr.bf16.gmra.mrb[0].mxu0 %v1984
      %v2118 = vpop.f32.mrb[0].mxu0
      %v2119 = vadd.f32 0.0, %v2118
      %v2120 = vpop.f32.mrb[0].mxu0
      %v2121 = vpop.f32.mrb[0].mxu0
      %v2122 = vadd.f32 0.0, %v2121
      %v2123 = vpop.f32.mrb[0].mxu0
      %2124 = vmatprep.mubr.bf16.mxu0 0
      %2125 = vmatmul.mubr.bf16.gmra.mrb[0].mxu0 %v1985
      %v2126 = vpop.f32.mrb[0].mxu0
      %v2127 = vadd.f32 0.0, %v2126
      %v2128 = vpop.f32.mrb[0].mxu0
      %v2129 = vpop.f32.mrb[0].mxu0
      %v2130 = vadd.f32 0.0, %v2129
      %v2131 = vpop.f32.mrb[0].mxu0
      %2132 = vmatprep.mubr.bf16.mxu0 0
      %2133 = vmatmul.mubr.bf16.gmra.mrb[0].mxu0 %v1986
      %v2134 = vpop.f32.mrb[0].mxu0
      %v2135 = vadd.f32 0.0, %v2134
      %v2136 = vpop.f32.mrb[0].mxu0
      %v2137 = vpop.f32.mrb[0].mxu0
      %v2138 = vadd.f32 0.0, %v2137
      %v2139 = vpop.f32.mrb[0].mxu0
      %2140 = vmatprep.mubr.bf16.mxu0 0
      %2141 = vmatmul.mubr.bf16.gmra.mrb[0].mxu0 %v1987
      %v2142 = vpop.f32.mrb[0].mxu0
      %v2143 = vadd.f32 0.0, %v2142
      %v2144 = vpop.f32.mrb[0].mxu0
      %v2145 = vpop.f32.mrb[0].mxu0
      %v2146 = vadd.f32 0.0, %v2145
      %v2147 = vpop.f32.mrb[0].mxu0
      %2148 = vdwg.mxu0
      %v2149 = vld [vmem:[%s8] sm:$0x1]
      %v2151 = vlaneseq
      %v2152 = vshrl.u32 %v2151, 7
      %v2153 = vsub.s32 0, %v2152
      %v2154 = vrot.slane %v2149, %v2153
      %v2156 = vmul.f32 %v2087, %v2154
      %v2157 = vmul.f32 %v2090, %v2154
      %v2158 = vmul.f32 %v2095, %v2154
      %v2159 = vmul.f32 %v2098, %v2154
      %v2160 = vmul.f32 %v2103, %v2154
      %v2161 = vmul.f32 %v2106, %v2154
      %v2162 = vmul.f32 %v2111, %v2154
      %v2163 = vmul.f32 %v2114, %v2154
      %v2164 = vmul.f32 %v2119, %v2154
      %v2165 = vmul.f32 %v2122, %v2154
      %v2166 = vmul.f32 %v2127, %v2154
      %v2167 = vmul.f32 %v2130, %v2154
      %v2168 = vmul.f32 %v2135, %v2154
      %v2169 = vmul.f32 %v2138, %v2154
      %v2170 = vmul.f32 %v2143, %v2154
      %v2171 = vmul.f32 %v2146, %v2154
      %v2172 = vld [vmem:[%s9] sm:$0x1]
      %v2174 = vlaneseq
      %v2175 = vshrl.u32 %v2174, 7
      %v2176 = vsub.s32 0, %v2175
      %v2177 = vrot.slane %v2172, %v2176
      %v2179 = vadd.f32 %v2156, %v2177
      %v2180 = vadd.f32 %v2157, %v2177
      %v2181 = vadd.f32 %v2158, %v2177
      %v2182 = vadd.f32 %v2159, %v2177
      %v2183 = vadd.f32 %v2160, %v2177
      %v2184 = vadd.f32 %v2161, %v2177
      %v2185 = vadd.f32 %v2162, %v2177
      %v2186 = vadd.f32 %v2163, %v2177
      %v2187 = vadd.f32 %v2164, %v2177
      %v2188 = vadd.f32 %v2165, %v2177
      %v2189 = vadd.f32 %v2166, %v2177
      %v2190 = vadd.f32 %v2167, %v2177
      %v2191 = vadd.f32 %v2168, %v2177
      %v2192 = vadd.f32 %v2169, %v2177
      %v2193 = vadd.f32 %v2170, %v2177
      %v2194 = vadd.f32 %v2171, %v2177
      %v2219 = vrot.slane %v504, 1
      %v2220 = vrot.slane %v505, 1
      %v2221 = vsel %vm1127, %v2219, %v2220
      %v2222 = vrot.slane %v506, 1
      %v2223 = vsel %vm1127, %v2220, %v2222
      %v2224 = vrot.slane %v507, 1
      %v2225 = vrot.slane %v508, 1
      %v2226 = vsel %vm1127, %v2224, %v2225
      %v2227 = vrot.slane %v509, 1
      %v2228 = vsel %vm1127, %v2225, %v2227
      %v2229 = vrot.slane %v510, 1
      %v2230 = vrot.slane %v511, 1
      %v2231 = vsel %vm1127, %v2229, %v2230
      %v2232 = vrot.slane %v512, 1
      %v2233 = vsel %vm1127, %v2230, %v2232
      %v2234 = vrot.slane %v513, 1
      %v2235 = vrot.slane %v514, 1
      %v2236 = vsel %vm1127, %v2234, %v2235
      %v2237 = vrot.slane %v515, 1
      %v2238 = vsel %vm1127, %v2235, %v2237
      %v2239 = vrot.slane %v516, 1
      %v2240 = vrot.slane %v517, 1
      %v2241 = vsel %vm1127, %v2239, %v2240
      %v2242 = vrot.slane %v518, 1
      %v2243 = vsel %vm1127, %v2240, %v2242
      %v2244 = vrot.slane %v519, 1
      %v2245 = vrot.slane %v520, 1
      %v2246 = vsel %vm1127, %v2244, %v2245
      %v2247 = vrot.slane %v521, 1
      %v2248 = vsel %vm1127, %v2245, %v2247
      %v2249 = vrot.slane %v522, 1
      %v2250 = vrot.slane %v523, 1
      %v2251 = vsel %vm1127, %v2249, %v2250
      %v2252 = vrot.slane %v524, 1
      %v2253 = vsel %vm1127, %v2250, %v2252
      %v2254 = vrot.slane %v525, 1
      %v2255 = vrot.slane %v526, 1
      %v2256 = vsel %vm1127, %v2254, %v2255
      %v2257 = vrot.slane %v527, 1
      %v2258 = vsel %vm1127, %v2255, %v2257
      %v2275 = vpack.c.bf16 %v2223, %v2221
      %v2276 = vpack.c.bf16 %v2228, %v2226
      %v2277 = vpack.c.bf16 %v2233, %v2231
      %v2278 = vpack.c.bf16 %v2238, %v2236
      %v2279 = vpack.c.bf16 %v2243, %v2241
      %v2280 = vpack.c.bf16 %v2248, %v2246
      %v2281 = vpack.c.bf16 %v2253, %v2251
      %v2282 = vpack.c.bf16 %v2258, %v2256
      %v2283 = vld [vmem:[%s10] sm:$0xf]
      %v2284 = vld [vmem:[%s10 + $0x4] sm:$0xf]
      %v2285 = vld [vmem:[%s10 + $0x8] sm:$0xf]
      %v2286 = vld [vmem:[%s10 + $0xc] sm:$0xf]
      %v2287 = vld [vmem:[%s10 + $0x10] sm:$0xf]
      %v2288 = vld [vmem:[%s10 + $0x14] sm:$0xf]
      %v2289 = vld [vmem:[%s10 + $0x18] sm:$0xf]
      %v2290 = vld [vmem:[%s10 + $0x1c] sm:$0xf]
      %v2291 = vld [vmem:[%s10 + $0x20] sm:$0xf]
      %v2292 = vld [vmem:[%s10 + $0x24] sm:$0xf]
      %v2293 = vld [vmem:[%s10 + $0x28] sm:$0xf]
      %v2294 = vld [vmem:[%s10 + $0x2c] sm:$0xf]
      %v2295 = vld [vmem:[%s10 + $0x30] sm:$0xf]
      %v2296 = vld [vmem:[%s10 + $0x34] sm:$0xf]
      %v2297 = vld [vmem:[%s10 + $0x38] sm:$0xf]
      %v2298 = vld [vmem:[%s10 + $0x3c] sm:$0xf]
      %v2315 = vunpack.c.l.b16 %v2283
      %v2316 = vunpack.c.l.b16 %v2284
      %v2317 = vunpack.c.l.b16 %v2285
      %v2318 = vunpack.c.l.b16 %v2286
      %v2319 = vunpack.c.l.b16 %v2287
      %v2320 = vunpack.c.l.b16 %v2288
      %v2321 = vunpack.c.l.b16 %v2289
      %v2322 = vunpack.c.l.b16 %v2290
      %v2323 = vunpack.c.l.b16 %v2291
      %v2324 = vunpack.c.l.b16 %v2292
      %v2325 = vunpack.c.l.b16 %v2293
      %v2326 = vunpack.c.l.b16 %v2294
      %v2327 = vunpack.c.l.b16 %v2295
      %v2328 = vunpack.c.l.b16 %v2296
      %v2329 = vunpack.c.l.b16 %v2297
      %v2330 = vunpack.c.l.b16 %v2298
      %v2331 = vpack.c.b16 %v2316, %v2315
      %v2332 = vpack.c.b16 %v2318, %v2317
      %v2333 = vpack.c.b16 %v2320, %v2319
      %v2334 = vpack.c.b16 %v2322, %v2321
      %v2335 = vpack.c.b16 %v2324, %v2323
      %v2336 = vpack.c.b16 %v2326, %v2325
      %v2337 = vpack.c.b16 %v2328, %v2327
      %v2338 = vpack.c.b16 %v2330, %v2329
      %2347 = vmatprep.subr.bf16.mxu0 0
      %2348 = vmatpush1.bf16.msra.mxu0 %v2331
      %2349 = vmatprep.subr.bf16.mxu0 0
      %2350 = vmatpush1.bf16.msra.mxu0 %v2332
      %2351 = vmatprep.subr.bf16.mxu0 0
      %2352 = vmatpush1.bf16.msra.mxu0 %v2333
      %2353 = vmatprep.subr.bf16.mxu0 0
      %2354 = vmatpush1.bf16.msra.mxu0 %v2334
      %2355 = vmatprep.subr.bf16.mxu0 0
      %2356 = vmatpush1.bf16.msra.mxu0 %v2335
      %2357 = vmatprep.subr.bf16.mxu0 0
      %2358 = vmatpush1.bf16.msra.mxu0 %v2336
      %2359 = vmatprep.subr.bf16.mxu0 0
      %2360 = vmatpush1.bf16.msra.mxu0 %v2337
      %2361 = vmatprep.subr.bf16.mxu0 0
      %2362 = vmatpush1.bf16.msra.mxu0 %v2338
      %2363 = vmatprep.subr.bf16.mxu0 0
      %2364 = vmatpush1.bf16.msra.mxu0 0
      %2365 = vmatprep.subr.bf16.mxu0 0
      %2366 = vmatpush1.bf16.msra.mxu0 0
      %2367 = vmatprep.subr.bf16.mxu0 0
      %2368 = vmatpush1.bf16.msra.mxu0 0
      %2369 = vmatprep.subr.bf16.mxu0 0
      %2370 = vmatpush1.bf16.msra.mxu0 0
      %2371 = vmatprep.subr.bf16.mxu0 0
      %2372 = vmatpush1.bf16.msra.mxu0 0
      %2373 = vmatprep.subr.bf16.mxu0 0
      %2374 = vmatpush1.bf16.msra.mxu0 0
      %2375 = vmatprep.subr.bf16.mxu0 0
      %2376 = vmatpush1.bf16.msra.mxu0 0
      %2377 = vmatprep.subr.bf16.mxu0 0
      %2378 = vmatpush1.bf16.msra.mxu0 0
      %2379 = vmatprep.mubr.bf16.mxu0 0
      %2380 = vmatmul.mubr.bf16.gmra.mrb[0].mxu0 %v2275
      %v2381 = vpop.f32.mrb[0].mxu0
      %v2382 = vadd.f32 0.0, %v2381
      %v2383 = vpop.f32.mrb[0].mxu0
      %v2384 = vpop.f32.mrb[0].mxu0
      %v2385 = vadd.f32 0.0, %v2384
      %v2386 = vpop.f32.mrb[0].mxu0
      %2387 = vmatprep.mubr.bf16.mxu0 0
      %2388 = vmatmul.mubr.bf16.gmra.mrb[0].mxu0 %v2276
      %v2389 = vpop.f32.mrb[0].mxu0
      %v2390 = vadd.f32 0.0, %v2389
      %v2391 = vpop.f32.mrb[0].mxu0
      %v2392 = vpop.f32.mrb[0].mxu0
      %v2393 = vadd.f32 0.0, %v2392
      %v2394 = vpop.f32.mrb[0].mxu0
      %2395 = vmatprep.mubr.bf16.mxu0 0
      %2396 = vmatmul.mubr.bf16.gmra.mrb[0].mxu0 %v2277
      %v2397 = vpop.f32.mrb[0].mxu0
      %v2398 = vadd.f32 0.0, %v2397
      %v2399 = vpop.f32.mrb[0].mxu0
      %v2400 = vpop.f32.mrb[0].mxu0
      %v2401 = vadd.f32 0.0, %v2400
      %v2402 = vpop.f32.mrb[0].mxu0
      %2403 = vmatprep.mubr.bf16.mxu0 0
      %2404 = vmatmul.mubr.bf16.gmra.mrb[0].mxu0 %v2278
      %v2405 = vpop.f32.mrb[0].mxu0
      %v2406 = vadd.f32 0.0, %v2405
      %v2407 = vpop.f32.mrb[0].mxu0
      %v2408 = vpop.f32.mrb[0].mxu0
      %v2409 = vadd.f32 0.0, %v2408
      %v2410 = vpop.f32.mrb[0].mxu0
      %2411 = vmatprep.mubr.bf16.mxu0 0
      %2412 = vmatmul.mubr.bf16.gmra.mrb[0].mxu0 %v2279
      %v2413 = vpop.f32.mrb[0].mxu0
      %v2414 = vadd.f32 0.0, %v2413
      %v2415 = vpop.f32.mrb[0].mxu0
      %v2416 = vpop.f32.mrb[0].mxu0
      %v2417 = vadd.f32 0.0, %v2416
      %v2418 = vpop.f32.mrb[0].mxu0
      %2419 = vmatprep.mubr.bf16.mxu0 0
      %2420 = vmatmul.mubr.bf16.gmra.mrb[0].mxu0 %v2280
      %v2421 = vpop.f32.mrb[0].mxu0
      %v2422 = vadd.f32 0.0, %v2421
      %v2423 = vpop.f32.mrb[0].mxu0
      %v2424 = vpop.f32.mrb[0].mxu0
      %v2425 = vadd.f32 0.0, %v2424
      %v2426 = vpop.f32.mrb[0].mxu0
      %2427 = vmatprep.mubr.bf16.mxu0 0
      %2428 = vmatmul.mubr.bf16.gmra.mrb[0].mxu0 %v2281
      %v2429 = vpop.f32.mrb[0].mxu0
      %v2430 = vadd.f32 0.0, %v2429
      %v2431 = vpop.f32.mrb[0].mxu0
      %v2432 = vpop.f32.mrb[0].mxu0
      %v2433 = vadd.f32 0.0, %v2432
      %v2434 = vpop.f32.mrb[0].mxu0
      %2435 = vmatprep.mubr.bf16.mxu0 0
      %2436 = vmatmul.mubr.bf16.gmra.mrb[0].mxu0 %v2282
      %v2437 = vpop.f32.mrb[0].mxu0
      %v2438 = vadd.f32 0.0, %v2437
      %v2439 = vpop.f32.mrb[0].mxu0
      %v2440 = vpop.f32.mrb[0].mxu0
      %v2441 = vadd.f32 0.0, %v2440
      %v2442 = vpop.f32.mrb[0].mxu0
      %2443 = vdwg.mxu0
      %v2444 = vld [vmem:[%s11] sm:$0x1]
      %v2446 = vlaneseq
      %v2447 = vshrl.u32 %v2446, 7
      %v2448 = vsub.s32 0, %v2447
      %v2449 = vrot.slane %v2444, %v2448
      %v2451 = vmul.f32 %v2382, %v2449
      %v2452 = vmul.f32 %v2385, %v2449
      %v2453 = vmul.f32 %v2390, %v2449
      %v2454 = vmul.f32 %v2393, %v2449
      %v2455 = vmul.f32 %v2398, %v2449
      %v2456 = vmul.f32 %v2401, %v2449
      %v2457 = vmul.f32 %v2406, %v2449
      %v2458 = vmul.f32 %v2409, %v2449
      %v2459 = vmul.f32 %v2414, %v2449
      %v2460 = vmul.f32 %v2417, %v2449
      %v2461 = vmul.f32 %v2422, %v2449
      %v2462 = vmul.f32 %v2425, %v2449
      %v2463 = vmul.f32 %v2430, %v2449
      %v2464 = vmul.f32 %v2433, %v2449
      %v2465 = vmul.f32 %v2438, %v2449
      %v2466 = vmul.f32 %v2441, %v2449
      %v2467 = vld [vmem:[%s12] sm:$0x1]
      %v2469 = vlaneseq
      %v2470 = vshrl.u32 %v2469, 7
      %v2471 = vsub.s32 0, %v2470
      %v2472 = vrot.slane %v2467, %v2471
      %v2474 = vadd.f32 %v2451, %v2472
      %v2475 = vadd.f32 %v2452, %v2472
      %v2476 = vadd.f32 %v2453, %v2472
      %v2477 = vadd.f32 %v2454, %v2472
      %v2478 = vadd.f32 %v2455, %v2472
      %v2479 = vadd.f32 %v2456, %v2472
      %v2480 = vadd.f32 %v2457, %v2472
      %v2481 = vadd.f32 %v2458, %v2472
      %v2482 = vadd.f32 %v2459, %v2472
      %v2483 = vadd.f32 %v2460, %v2472
      %v2484 = vadd.f32 %v2461, %v2472
      %v2485 = vadd.f32 %v2462, %v2472
      %v2486 = vadd.f32 %v2463, %v2472
      %v2487 = vadd.f32 %v2464, %v2472
      %v2488 = vadd.f32 %v2465, %v2472
      %v2489 = vadd.f32 %v2466, %v2472
      %v2490 = vadd.f32 %v2179, %v2474
      %v2491 = vadd.f32 %v2180, %v2475
      %v2492 = vadd.f32 %v2181, %v2476
      %v2493 = vadd.f32 %v2182, %v2477
      %v2494 = vadd.f32 %v2183, %v2478
      %v2495 = vadd.f32 %v2184, %v2479
      %v2496 = vadd.f32 %v2185, %v2480
      %v2497 = vadd.f32 %v2186, %v2481
      %v2498 = vadd.f32 %v2187, %v2482
      %v2499 = vadd.f32 %v2188, %v2483
      %v2500 = vadd.f32 %v2189, %v2484
      %v2501 = vadd.f32 %v2190, %v2485
      %v2502 = vadd.f32 %v2191, %v2486
      %v2503 = vadd.f32 %v2192, %v2487
      %v2504 = vadd.f32 %v2193, %v2488
      %v2505 = vadd.f32 %v2194, %v2489
      %2506 = vst [vmem:[%s464] sm:$0xff] %v2490
      %2507 = vst [vmem:[%s464 + $0x8] sm:$0xff] %v2491
      %2508 = vst [vmem:[%s464 + $0x10] sm:$0xff] %v2492
      %2509 = vst [vmem:[%s464 + $0x18] sm:$0xff] %v2493
      %2510 = vst [vmem:[%s464 + $0x20] sm:$0xff] %v2494
      %2511 = vst [vmem:[%s464 + $0x28] sm:$0xff] %v2495
      %2512 = vst [vmem:[%s464 + $0x30] sm:$0xff] %v2496
      %2513 = vst [vmem:[%s464 + $0x38] sm:$0xff] %v2497
      %2514 = vst [vmem:[%s464 + $0x40] sm:$0xff] %v2498
      %2515 = vst [vmem:[%s464 + $0x48] sm:$0xff] %v2499
      %2516 = vst [vmem:[%s464 + $0x50] sm:$0xff] %v2500
      %2517 = vst [vmem:[%s464 + $0x58] sm:$0xff] %v2501
      %2518 = vst [vmem:[%s464 + $0x60] sm:$0xff] %v2502
      %2519 = vst [vmem:[%s464 + $0x68] sm:$0xff] %v2503
      %2520 = vst [vmem:[%s464 + $0x70] sm:$0xff] %v2504
      %2521 = vst [vmem:[%s464 + $0x78] sm:$0xff] %v2505
      %s2522 = smul.u32 8, %s29
      %p2523 = scmp.lt.s32.totalorder %s28, 1
      %s2524 = scalar_select %p2523, %s28, 1
      %p2525 = scmp.lt.s32.totalorder %s2522, 15
      %s2526 = scalar_select %p2525, %s2522, 15
      %s2527 = smul.addr %s2526, 2
      %s2528 = smul.addr %s2524, 32
      %s2529 = sadd.s32 %s2527, %s2528
      %s2530 = smul.addr %s2529, 8
      %s2531 = scalar_lea.vmem %s13, %s2530
      // Predicated region
      $region73: #{blk_stride_forward.1} parent=71 // pred_check
        %p2532 = pneg %p334
      $region74: #{blk_stride_forward.1} parent=71 // pred_check_branch
        %2534 = sbr.rel (%p2532) target = $region76
      $region75: #{blk_stride_forward.1} parent=71 // pred_region
        %s2535 = smul.u32 8, %s29
      $region76: #{blk_stride_forward.1} parent=71 // pred_fallthru
        _
    $region72: #{blk_stride_forward.1} parent=5 // pred_fallthru
      _
    %p2536 = scmp.le.s32.totalorder 2, %s19
    // Predicated region
    $region77: #{blk_stride_forward.1} parent=5 // pred_check
      %p2537 = pneg %p2536
    $region78: #{blk_stride_forward.1} parent=5 // pred_check_branch
      %2539 = sbr.rel (%p2537) target = $region80
    $region79: #{blk_stride_forward.1} parent=5 // pred_region
      %s2540 = ssub.s32 %s19, 2
      // Predicated region
      $region81: #{blk_stride_forward.1} parent=79 // pred_check
        %p2541 = pneg %p340
      $region82: #{blk_stride_forward.1} parent=79 // pred_check_branch
        %2543 = sbr.rel (%p2541) target = $region84
      $region83: #{blk_stride_forward.1} parent=79 // pred_region
        %s2544 = smul.u32 8, %s31
        %p2545 = scmp.lt.s32.totalorder %s30, 1
        %s2546 = scalar_select %p2545, %s30, 1
        %p2547 = scmp.lt.s32.totalorder %s2544, 15
        %s2548 = scalar_select %p2547, %s2544, 15
        %s2549 = smul.addr %s2548, 2
        %s2550 = smul.addr %s2546, 32
        %s2551 = sadd.s32 %s2549, %s2550
        %s2552 = smul.addr %s2551, 8
        %s2553 = scalar_lea.vmem %s13, %s2552
      $region84: #{blk_stride_forward.1} parent=79 // pred_fallthru
        _
    $region80: #{blk_stride_forward.1} parent=5 // pred_fallthru
      _
  $region6: #{blk_stride_forward.1} parent=0 // loop_footer
    %s23 = sadd.s32 1, %s19
  $region7: #{blk_stride_forward.1} parent=0 // loop_footer_branch
    %18 = sbr.rel target = $region3
  $region8: #{blk_stride_forward.1} parent=0 // loop_exit
    _

</llo_original>
